<compile_context>
chip_gen: v7x
topology: tpu7x:2x2x1
jax: 0.10.0
libtpu: 0.0.40
codegen_flags: <defaults>
</compile_context>

<pallas_src>
import functools

import jax
import jax.numpy as jnp
from jax.experimental import pallas as pl
from jax.experimental.pallas import tpu as pltpu


def _birnn_kernel(codes_ref,   # (T*Rp, 1) int32: fwd token, or num_classes+token (time-reversed) for bwd rows
                  wx_ref,      # (NCP, 4H) f32: folded transfer+W_ih+biases, [i,f,o,g], i/f/o cols pre-scaled by 0.5
                  whh_ref,     # (H, 8H)  f32: [W_hh_fwd | W_hh_bwd], [i,f,o,g], i/f/o cols pre-scaled by 0.5
                  wfc_ref,     # (2H, OP) f32 (pre-transposed, lane-padded)
                  bfc_ref,     # (1, OP)  f32 (lane-padded)
                  out_ref,     # (Bp, OP) f32
                  *, seq_len, padded_batch, hidden_dim, onehot_width):
    T, Bp, H = seq_len, padded_batch, hidden_dim
    Rp = 2 * Bp          # fwd + bwd batch rows processed together
    G = 4 * H            # gates per direction

    # ---- whole-sequence input gates for both directions: ONE matmul ---------
    codes = codes_ref[...]                                                  # (T*Rp, 1)
    onehot = (codes == jax.lax.broadcasted_iota(jnp.int32, (T * Rp, onehot_width), 1)
              ).astype(jnp.float32)                                         # (T*Rp, NCP)
    xg = jnp.dot(onehot, wx_ref[...],
                 preferred_element_type=jnp.float32)                        # (T*Rp, 4H), biases folded in

    whh = whh_ref[...]                                                      # (H, 8H)

    # ---- hoisted loop-invariant masks (built once, reused every step) -------
    row_is_fwd = jax.lax.broadcasted_iota(jnp.int32, (Rp, G), 0) < Bp       # rows [0,Bp) = fwd
    lane_is_sig = jax.lax.broadcasted_iota(jnp.int32, (Rp, G), 1) < 3 * H   # lanes [0,3H) = i/f/o
    act_scale = jnp.where(lane_is_sig, 0.5, 1.0).astype(jnp.float32)
    act_shift = jnp.where(lane_is_sig, 0.5, 0.0).astype(jnp.float32)

    h = jnp.zeros((Rp, H), jnp.float32)                                     # rows: [fwd block | bwd block]
    c = jnp.zeros((Rp, H), jnp.float32)

    # ---- fused bidirectional recurrence, statically unrolled ----------------
    for s in range(T):
        hg = jnp.dot(h, whh, preferred_element_type=jnp.float32)            # (Rp, 8H): one MXU op / step
        # fwd rows take the fwd gate half, bwd rows the bwd gate half (128-lane halves, VPU select).
        gates = (jnp.where(row_is_fwd, hg[:, :G], hg[:, G:])
                 + xg[s * Rp:(s + 1) * Rp, :])                               # (Rp, 4H) [i|f|o|g], tile-aligned slice
        t = jnp.tanh(gates)                                                  # ONE full-width EUP push
        act = t * act_scale + act_shift                                      # sigmoid on i/f/o lanes, tanh on g lanes
        i_g = act[:, 0 * H:1 * H]
        f_g = act[:, 1 * H:2 * H]
        o_g = act[:, 2 * H:3 * H]
        g_g = act[:, 3 * H:4 * H]
        c = f_g * c + i_g * g_g
        h = o_g * jnp.tanh(c)

    # ---- fc on concat(h_fwd, h_bwd), done as a split matmul (epilogue) ------
    wfc = wfc_ref[...]
    y = (jnp.dot(h[:Bp, :], wfc[:H, :], preferred_element_type=jnp.float32)
         + jnp.dot(h[Bp:, :], wfc[H:, :], preferred_element_type=jnp.float32)
         + bfc_ref[...])
    out_ref[...] = y                                                         # full (Bp, OP) lane-dense store


def birnn_forward(dnn_seq, params, *, hidden_dim, output_dim, num_classes=6):
    """dnn_seq: (B, T) int32 tokens in [0, num_classes)."""
    B, T = dnn_seq.shape
    H = hidden_dim
    hp = jax.lax.Precision.HIGHEST

    Bp = max(8, ((B + 7) // 8) * 8)                 # pad batch rows to full sublane tiles
    Rp = 2 * Bp
    NC2 = 2 * num_classes
    NCP = ((NC2 + 7) // 8) * 8                      # pad one-hot width so K % 8 == 0
    OP = ((output_dim + 127) // 128) * 128          # lane-dense output width

    # Gate-column permutation [i, f, g, o] -> [i, f, o, g] so the sigmoid lanes
    # are one contiguous block.
    perm = jnp.concatenate([jnp.arange(0, 2 * H),
                            jnp.arange(3 * H, 4 * H),
                            jnp.arange(2 * H, 3 * H)])
    # Pre-scale i/f/o columns (biases included) by 0.5: sigmoid(x)=0.5*(tanh(x/2)+1).
    col_scale = jnp.concatenate([jnp.full((3 * H,), 0.5, jnp.float32),
                                 jnp.ones((H,), jnp.float32)])[None, :]     # (1, 4H)

    def fold(wih, whh, b):
        wih_p, whh_p, b_p = wih[:, perm], whh[:, perm], b[:, perm]
        # Fold transfer Linear + all biases into the input projection:
        # onehot @ wt @ wih + bt @ wih + b  ==  onehot @ wx   (one-hot rows sum to 1).
        wx = (jnp.dot(params["wt"], wih_p, precision=hp)
              + jnp.dot(params["bt"], wih_p, precision=hp) + b_p)           # (num_classes, 4H)
        return wx * col_scale, whh_p * col_scale

    wx_f, whh_f = fold(params["wih_f"], params["whh_f"], params["b_f"])
    wx_b, whh_b = fold(params["wih_b"], params["whh_b"], params["b_b"])
    wx = jnp.zeros((NCP, 4 * H), jnp.float32)
    wx = wx.at[:num_classes].set(wx_f).at[num_classes:NC2].set(wx_b)        # (NCP, 4H)
    whh_both = jnp.concatenate([whh_f, whh_b], axis=1)                      # (H, 8H)

    # Token codes laid out (time, [fwd batch | pad | bwd batch | pad]); bwd rows
    # are time-reversed and offset by num_classes so a single one-hot matmul
    # yields the per-step input gates for both directions.  Dummy pad rows get
    # token 0; their states are computed but never read out.
    fwd_codes = jnp.transpose(dnn_seq).astype(jnp.int32)                    # (T, B)
    bwd_codes = jnp.transpose(dnn_seq[:, ::-1]).astype(jnp.int32) + num_classes
    pad = jnp.zeros((T, Bp - B), jnp.int32)
    codes = jnp.concatenate([fwd_codes, pad, bwd_codes, pad], axis=1)       # (T, Rp)
    codes = codes.reshape(T * Rp, 1)

    # fc weights/bias lane-padded so the kernel's output store is a full tile.
    wfc_pad = jnp.zeros((2 * H, OP), jnp.float32).at[:, :output_dim].set(params["wfc"])
    bfc_pad = jnp.zeros((1, OP), jnp.float32).at[:, :output_dim].set(params["bfc"])

    kernel = functools.partial(_birnn_kernel, seq_len=T, padded_batch=Bp,
                               hidden_dim=H, onehot_width=NCP)
    vmem = pl.BlockSpec(memory_space=pltpu.MemorySpace.VMEM)
    # TODO(synk): for large batches, add a batch-tile grid with
    # dimension_semantics=("parallel",) so v7x's second TensorCore is used and
    # xg is computed per tile within the 64 MiB VMEM budget.
    y_full = pl.pallas_call(
        kernel,
        out_shape=jax.ShapeDtypeStruct((Bp, OP), jnp.float32),
        in_specs=[vmem] * 5,
        out_specs=vmem,
    )(codes, wx, whh_both, wfc_pad, bfc_pad)
    return y_full[:B, :output_dim]


def birnn_reference(dnn_seq, params, *, hidden_dim, num_classes=6):
    """Pure-JAX reference reproducing the PyTorch module semantics."""
    B, T = dnn_seq.shape
    H = hidden_dim
    hp = jax.lax.Precision.HIGHEST
    onehot = jax.nn.one_hot(dnn_seq, num_classes, dtype=jnp.float32)        # (B, T, 6)
    x = jnp.matmul(onehot, params["wt"], precision=hp) + params["bt"]       # (B, T, H)

    def step(carry, x_t, wih, whh, b):
        h, c = carry
        gates = (jnp.dot(x_t, wih, precision=hp)
                 + jnp.dot(h, whh, precision=hp) + b)
        i_g = jax.nn.sigmoid(gates[:, 0 * H:1 * H])
        f_g = jax.nn.sigmoid(gates[:, 1 * H:2 * H])
        g_g = jnp.tanh(gates[:, 2 * H:3 * H])
        o_g = jax.nn.sigmoid(gates[:, 3 * H:4 * H])
        c = f_g * c + i_g * g_g
        h = o_g * jnp.tanh(c)
        return (h, c), None

    h0 = jnp.zeros((B, H), jnp.float32)
    c0 = jnp.zeros((B, H), jnp.float32)

    (h_fwd, _), _ = jax.lax.scan(
        lambda carry, xt: step(carry, xt, params["wih_f"], params["whh_f"], params["b_f"]),
        (h0, c0), jnp.swapaxes(x, 0, 1))
    (h_bwd, _), _ = jax.lax.scan(
        lambda carry, xt: step(carry, xt, params["wih_b"], params["whh_b"], params["b_b"]),
        (h0, c0), jnp.swapaxes(x, 0, 1)[::-1])

    h_comb = jnp.concatenate([h_fwd, h_bwd], axis=1)                        # (B, 2H)
    return jnp.dot(h_comb, params["wfc"], precision=hp) + params["bfc"]


def init_params(key, input_dim, hidden_dim, output_dim):
    H = hidden_dim
    ks = jax.random.split(key, 12)
    scale = 0.1

    def rnd(k, shape):
        return (scale * jax.random.normal(k, shape)).astype(jnp.float32)

    # Dense weights stored pre-transposed as (in, out); LSTM gate column order
    # is PyTorch's [i, f, g, o]; LSTM biases b_ih + b_hh combined.
    return {
        "wt": rnd(ks[0], (input_dim, H)),
        "bt": rnd(ks[1], (1, H)),
        "wih_f": rnd(ks[2], (H, 4 * H)),
        "whh_f": rnd(ks[3], (H, 4 * H)),
        "b_f": rnd(ks[4], (1, 4 * H)) + rnd(ks[5], (1, 4 * H)),
        "wih_b": rnd(ks[6], (H, 4 * H)),
        "whh_b": rnd(ks[7], (H, 4 * H)),
        "b_b": rnd(ks[8], (1, 4 * H)) + rnd(ks[9], (1, 4 * H)),
        "wfc": rnd(ks[10], (2 * H, output_dim)),
        "bfc": rnd(ks[11], (1, output_dim)),
    }


if __name__ == "__main__":
    B, T = 2, 8
    input_dim = 6          # matches num_classes=6 one-hot fed into `transfer`
    hidden_dim = 32
    output_dim = 4

    key = jax.random.PRNGKey(0)
    k_seq, k_par = jax.random.split(key)
    dnn_seq = jax.random.randint(k_seq, (B, T), 0, 6, dtype=jnp.int32)
    params = init_params(k_par, input_dim, hidden_dim, output_dim)

    y = birnn_forward(dnn_seq, params, hidden_dim=hidden_dim, output_dim=output_dim)
    y = jax.block_until_ready(y)

    y_ref = birnn_reference(dnn_seq, params, hidden_dim=hidden_dim)
    assert y.shape == (B, output_dim)
    # 1e-4 tolerance: in-kernel matmuls use Mosaic's default f32 precision and
    # sigmoid is computed via tanh (expected tiny numeric differences).
    assert jnp.allclose(y, y_ref, atol=1e-4, rtol=1e-4), (y, y_ref)

    print("KERNEL_OK")
</pallas_src>

<mosaic_0001>
module attributes {stable_mosaic.version = 11 : i64} {
  func.func @_birnn_kernel(%arg0: memref<128x1xi32, #tpu.memory_space<vmem>>, %arg1: memref<16x128xf32, #tpu.memory_space<vmem>>, %arg2: memref<32x256xf32, #tpu.memory_space<vmem>>, %arg3: memref<64x128xf32, #tpu.memory_space<vmem>>, %arg4: memref<1x128xf32, #tpu.memory_space<vmem>>, %arg5: memref<8x128xf32, #tpu.memory_space<vmem>>) attributes {dimension_semantics = [], scalar_prefetch = 0 : i64, scratch_operands = 0 : i64, tpu.core_type = #tpu.core_type<tc>} {
    %c0 = arith.constant 0 : index
    %c0_0 = arith.constant 0 : index
    %0 = vector.load %arg0[%c0, %c0_0] : memref<128x1xi32, #tpu.memory_space<vmem>>, vector<128x1xi32>
    %1 = tpu.iota {dimensions = array<i32: 1>} : vector<128x16xi32>
    %2 = vector.broadcast %0 : vector<128x1xi32> to vector<128x16xi32>
    %3 = arith.cmpi eq, %2, %1 : vector<128x16xi32>
    %4 = arith.extui %3 : vector<128x16xi1> to vector<128x16xi32>
    %5 = arith.sitofp %4 : vector<128x16xi32> to vector<128x16xf32>
    %c0_1 = arith.constant 0 : index
    %c0_2 = arith.constant 0 : index
    %6 = vector.load %arg1[%c0_1, %c0_2] : memref<16x128xf32, #tpu.memory_space<vmem>>, vector<16x128xf32>
    %cst = arith.constant dense<0.000000e+00> : vector<128x128xf32>
    %7 = tpu.matmul %5, %6, %cst {dimension_numbers = #tpu.dot_dimension_numbers<[1], [0], [0], [1], [0, 0, 1, 1], [], []>} : vector<128x16xf32>, vector<16x128xf32>, vector<128x128xf32> -> vector<128x128xf32>
    %c0_3 = arith.constant 0 : index
    %c0_4 = arith.constant 0 : index
    %8 = vector.load %arg2[%c0_3, %c0_4] : memref<32x256xf32, #tpu.memory_space<vmem>>, vector<32x256xf32>
    %9 = tpu.iota {dimensions = array<i32: 0>} : vector<16x128xi32>
    %c8_i32 = arith.constant 8 : i32
    %10 = vector.broadcast %c8_i32 : i32 to vector<16x128xi32>
    %11 = arith.cmpi slt, %9, %10 : vector<16x128xi32>
    %12 = tpu.iota {dimensions = array<i32: 1>} : vector<16x128xi32>
    %c96_i32 = arith.constant 96 : i32
    %13 = vector.broadcast %c96_i32 : i32 to vector<16x128xi32>
    %14 = arith.cmpi slt, %12, %13 : vector<16x128xi32>
    %cst_5 = arith.constant 5.000000e-01 : f32
    %cst_6 = arith.constant 1.000000e+00 : f32
    %15 = vector.broadcast %cst_5 : f32 to vector<16x128xf32>
    %16 = vector.broadcast %cst_6 : f32 to vector<16x128xf32>
    %17 = arith.select %14, %15, %16 : vector<16x128xi1>, vector<16x128xf32>
    %cst_7 = arith.constant 5.000000e-01 : f32
    %cst_8 = arith.constant 0.000000e+00 : f32
    %18 = vector.broadcast %cst_7 : f32 to vector<16x128xf32>
    %19 = vector.broadcast %cst_8 : f32 to vector<16x128xf32>
    %20 = arith.select %14, %18, %19 : vector<16x128xi1>, vector<16x128xf32>
    %cst_9 = arith.constant 0.000000e+00 : f32
    %21 = vector.broadcast %cst_9 : f32 to vector<16x32xf32>
    %cst_10 = arith.constant 0.000000e+00 : f32
    %22 = vector.broadcast %cst_10 : f32 to vector<16x32xf32>
    %cst_11 = arith.constant dense<0.000000e+00> : vector<16x256xf32>
    %23 = tpu.matmul %21, %8, %cst_11 {dimension_numbers = #tpu.dot_dimension_numbers<[1], [0], [0], [1], [0, 0, 1, 1], [], []>} : vector<16x32xf32>, vector<32x256xf32>, vector<16x256xf32> -> vector<16x256xf32>
    %24 = vector.extract_strided_slice %23 {offsets = [0, 0], sizes = [16, 128], strides = [1, 1]} : vector<16x256xf32> to vector<16x128xf32>
    %25 = vector.extract_strided_slice %23 {offsets = [0, 128], sizes = [16, 128], strides = [1, 1]} : vector<16x256xf32> to vector<16x128xf32>
    %26 = arith.select %11, %24, %25 : vector<16x128xi1>, vector<16x128xf32>
    %27 = vector.extract_strided_slice %7 {offsets = [0, 0], sizes = [16, 128], strides = [1, 1]} : vector<128x128xf32> to vector<16x128xf32>
    %28 = arith.addf %26, %27 : vector<16x128xf32>
    %29 = math.tanh %28 : vector<16x128xf32>
    %30 = arith.mulf %29, %17 : vector<16x128xf32>
    %31 = arith.addf %30, %20 : vector<16x128xf32>
    %32 = vector.extract_strided_slice %31 {offsets = [0, 0], sizes = [16, 32], strides = [1, 1]} : vector<16x128xf32> to vector<16x32xf32>
    %33 = vector.extract_strided_slice %31 {offsets = [0, 32], sizes = [16, 32], strides = [1, 1]} : vector<16x128xf32> to vector<16x32xf32>
    %34 = vector.extract_strided_slice %31 {offsets = [0, 64], sizes = [16, 32], strides = [1, 1]} : vector<16x128xf32> to vector<16x32xf32>
    %35 = vector.extract_strided_slice %31 {offsets = [0, 96], sizes = [16, 32], strides = [1, 1]} : vector<16x128xf32> to vector<16x32xf32>
    %36 = arith.mulf %33, %22 : vector<16x32xf32>
    %37 = arith.mulf %32, %35 : vector<16x32xf32>
    %38 = arith.addf %36, %37 : vector<16x32xf32>
    %39 = math.tanh %38 : vector<16x32xf32>
    %40 = arith.mulf %34, %39 : vector<16x32xf32>
    %cst_12 = arith.constant dense<0.000000e+00> : vector<16x256xf32>
    %41 = tpu.matmul %40, %8, %cst_12 {dimension_numbers = #tpu.dot_dimension_numbers<[1], [0], [0], [1], [0, 0, 1, 1], [], []>} : vector<16x32xf32>, vector<32x256xf32>, vector<16x256xf32> -> vector<16x256xf32>
    %42 = vector.extract_strided_slice %41 {offsets = [0, 0], sizes = [16, 128], strides = [1, 1]} : vector<16x256xf32> to vector<16x128xf32>
    %43 = vector.extract_strided_slice %41 {offsets = [0, 128], sizes = [16, 128], strides = [1, 1]} : vector<16x256xf32> to vector<16x128xf32>
    %44 = arith.select %11, %42, %43 : vector<16x128xi1>, vector<16x128xf32>
    %45 = vector.extract_strided_slice %7 {offsets = [16, 0], sizes = [16, 128], strides = [1, 1]} : vector<128x128xf32> to vector<16x128xf32>
    %46 = arith.addf %44, %45 : vector<16x128xf32>
    %47 = math.tanh %46 : vector<16x128xf32>
    %48 = arith.mulf %47, %17 : vector<16x128xf32>
    %49 = arith.addf %48, %20 : vector<16x128xf32>
    %50 = vector.extract_strided_slice %49 {offsets = [0, 0], sizes = [16, 32], strides = [1, 1]} : vector<16x128xf32> to vector<16x32xf32>
    %51 = vector.extract_strided_slice %49 {offsets = [0, 32], sizes = [16, 32], strides = [1, 1]} : vector<16x128xf32> to vector<16x32xf32>
    %52 = vector.extract_strided_slice %49 {offsets = [0, 64], sizes = [16, 32], strides = [1, 1]} : vector<16x128xf32> to vector<16x32xf32>
    %53 = vector.extract_strided_slice %49 {offsets = [0, 96], sizes = [16, 32], strides = [1, 1]} : vector<16x128xf32> to vector<16x32xf32>
    %54 = arith.mulf %51, %38 : vector<16x32xf32>
    %55 = arith.mulf %50, %53 : vector<16x32xf32>
    %56 = arith.addf %54, %55 : vector<16x32xf32>
    %57 = math.tanh %56 : vector<16x32xf32>
    %58 = arith.mulf %52, %57 : vector<16x32xf32>
    %cst_13 = arith.constant dense<0.000000e+00> : vector<16x256xf32>
    %59 = tpu.matmul %58, %8, %cst_13 {dimension_numbers = #tpu.dot_dimension_numbers<[1], [0], [0], [1], [0, 0, 1, 1], [], []>} : vector<16x32xf32>, vector<32x256xf32>, vector<16x256xf32> -> vector<16x256xf32>
    %60 = vector.extract_strided_slice %59 {offsets = [0, 0], sizes = [16, 128], strides = [1, 1]} : vector<16x256xf32> to vector<16x128xf32>
    %61 = vector.extract_strided_slice %59 {offsets = [0, 128], sizes = [16, 128], strides = [1, 1]} : vector<16x256xf32> to vector<16x128xf32>
    %62 = arith.select %11, %60, %61 : vector<16x128xi1>, vector<16x128xf32>
    %63 = vector.extract_strided_slice %7 {offsets = [32, 0], sizes = [16, 128], strides = [1, 1]} : vector<128x128xf32> to vector<16x128xf32>
    %64 = arith.addf %62, %63 : vector<16x128xf32>
    %65 = math.tanh %64 : vector<16x128xf32>
    %66 = arith.mulf %65, %17 : vector<16x128xf32>
    %67 = arith.addf %66, %20 : vector<16x128xf32>
    %68 = vector.extract_strided_slice %67 {offsets = [0, 0], sizes = [16, 32], strides = [1, 1]} : vector<16x128xf32> to vector<16x32xf32>
    %69 = vector.extract_strided_slice %67 {offsets = [0, 32], sizes = [16, 32], strides = [1, 1]} : vector<16x128xf32> to vector<16x32xf32>
    %70 = vector.extract_strided_slice %67 {offsets = [0, 64], sizes = [16, 32], strides = [1, 1]} : vector<16x128xf32> to vector<16x32xf32>
    %71 = vector.extract_strided_slice %67 {offsets = [0, 96], sizes = [16, 32], strides = [1, 1]} : vector<16x128xf32> to vector<16x32xf32>
    %72 = arith.mulf %69, %56 : vector<16x32xf32>
    %73 = arith.mulf %68, %71 : vector<16x32xf32>
    %74 = arith.addf %72, %73 : vector<16x32xf32>
    %75 = math.tanh %74 : vector<16x32xf32>
    %76 = arith.mulf %70, %75 : vector<16x32xf32>
    %cst_14 = arith.constant dense<0.000000e+00> : vector<16x256xf32>
    %77 = tpu.matmul %76, %8, %cst_14 {dimension_numbers = #tpu.dot_dimension_numbers<[1], [0], [0], [1], [0, 0, 1, 1], [], []>} : vector<16x32xf32>, vector<32x256xf32>, vector<16x256xf32> -> vector<16x256xf32>
    %78 = vector.extract_strided_slice %77 {offsets = [0, 0], sizes = [16, 128], strides = [1, 1]} : vector<16x256xf32> to vector<16x128xf32>
    %79 = vector.extract_strided_slice %77 {offsets = [0, 128], sizes = [16, 128], strides = [1, 1]} : vector<16x256xf32> to vector<16x128xf32>
    %80 = arith.select %11, %78, %79 : vector<16x128xi1>, vector<16x128xf32>
    %81 = vector.extract_strided_slice %7 {offsets = [48, 0], sizes = [16, 128], strides = [1, 1]} : vector<128x128xf32> to vector<16x128xf32>
    %82 = arith.addf %80, %81 : vector<16x128xf32>
    %83 = math.tanh %82 : vector<16x128xf32>
    %84 = arith.mulf %83, %17 : vector<16x128xf32>
    %85 = arith.addf %84, %20 : vector<16x128xf32>
    %86 = vector.extract_strided_slice %85 {offsets = [0, 0], sizes = [16, 32], strides = [1, 1]} : vector<16x128xf32> to vector<16x32xf32>
    %87 = vector.extract_strided_slice %85 {offsets = [0, 32], sizes = [16, 32], strides = [1, 1]} : vector<16x128xf32> to vector<16x32xf32>
    %88 = vector.extract_strided_slice %85 {offsets = [0, 64], sizes = [16, 32], strides = [1, 1]} : vector<16x128xf32> to vector<16x32xf32>
    %89 = vector.extract_strided_slice %85 {offsets = [0, 96], sizes = [16, 32], strides = [1, 1]} : vector<16x128xf32> to vector<16x32xf32>
    %90 = arith.mulf %87, %74 : vector<16x32xf32>
    %91 = arith.mulf %86, %89 : vector<16x32xf32>
    %92 = arith.addf %90, %91 : vector<16x32xf32>
    %93 = math.tanh %92 : vector<16x32xf32>
    %94 = arith.mulf %88, %93 : vector<16x32xf32>
    %cst_15 = arith.constant dense<0.000000e+00> : vector<16x256xf32>
    %95 = tpu.matmul %94, %8, %cst_15 {dimension_numbers = #tpu.dot_dimension_numbers<[1], [0], [0], [1], [0, 0, 1, 1], [], []>} : vector<16x32xf32>, vector<32x256xf32>, vector<16x256xf32> -> vector<16x256xf32>
    %96 = vector.extract_strided_slice %95 {offsets = [0, 0], sizes = [16, 128], strides = [1, 1]} : vector<16x256xf32> to vector<16x128xf32>
    %97 = vector.extract_strided_slice %95 {offsets = [0, 128], sizes = [16, 128], strides = [1, 1]} : vector<16x256xf32> to vector<16x128xf32>
    %98 = arith.select %11, %96, %97 : vector<16x128xi1>, vector<16x128xf32>
    %99 = vector.extract_strided_slice %7 {offsets = [64, 0], sizes = [16, 128], strides = [1, 1]} : vector<128x128xf32> to vector<16x128xf32>
    %100 = arith.addf %98, %99 : vector<16x128xf32>
    %101 = math.tanh %100 : vector<16x128xf32>
    %102 = arith.mulf %101, %17 : vector<16x128xf32>
    %103 = arith.addf %102, %20 : vector<16x128xf32>
    %104 = vector.extract_strided_slice %103 {offsets = [0, 0], sizes = [16, 32], strides = [1, 1]} : vector<16x128xf32> to vector<16x32xf32>
    %105 = vector.extract_strided_slice %103 {offsets = [0, 32], sizes = [16, 32], strides = [1, 1]} : vector<16x128xf32> to vector<16x32xf32>
    %106 = vector.extract_strided_slice %103 {offsets = [0, 64], sizes = [16, 32], strides = [1, 1]} : vector<16x128xf32> to vector<16x32xf32>
    %107 = vector.extract_strided_slice %103 {offsets = [0, 96], sizes = [16, 32], strides = [1, 1]} : vector<16x128xf32> to vector<16x32xf32>
    %108 = arith.mulf %105, %92 : vector<16x32xf32>
    %109 = arith.mulf %104, %107 : vector<16x32xf32>
    %110 = arith.addf %108, %109 : vector<16x32xf32>
    %111 = math.tanh %110 : vector<16x32xf32>
    %112 = arith.mulf %106, %111 : vector<16x32xf32>
    %cst_16 = arith.constant dense<0.000000e+00> : vector<16x256xf32>
    %113 = tpu.matmul %112, %8, %cst_16 {dimension_numbers = #tpu.dot_dimension_numbers<[1], [0], [0], [1], [0, 0, 1, 1], [], []>} : vector<16x32xf32>, vector<32x256xf32>, vector<16x256xf32> -> vector<16x256xf32>
    %114 = vector.extract_strided_slice %113 {offsets = [0, 0], sizes = [16, 128], strides = [1, 1]} : vector<16x256xf32> to vector<16x128xf32>
    %115 = vector.extract_strided_slice %113 {offsets = [0, 128], sizes = [16, 128], strides = [1, 1]} : vector<16x256xf32> to vector<16x128xf32>
    %116 = arith.select %11, %114, %115 : vector<16x128xi1>, vector<16x128xf32>
    %117 = vector.extract_strided_slice %7 {offsets = [80, 0], sizes = [16, 128], strides = [1, 1]} : vector<128x128xf32> to vector<16x128xf32>
    %118 = arith.addf %116, %117 : vector<16x128xf32>
    %119 = math.tanh %118 : vector<16x128xf32>
    %120 = arith.mulf %119, %17 : vector<16x128xf32>
    %121 = arith.addf %120, %20 : vector<16x128xf32>
    %122 = vector.extract_strided_slice %121 {offsets = [0, 0], sizes = [16, 32], strides = [1, 1]} : vector<16x128xf32> to vector<16x32xf32>
    %123 = vector.extract_strided_slice %121 {offsets = [0, 32], sizes = [16, 32], strides = [1, 1]} : vector<16x128xf32> to vector<16x32xf32>
    %124 = vector.extract_strided_slice %121 {offsets = [0, 64], sizes = [16, 32], strides = [1, 1]} : vector<16x128xf32> to vector<16x32xf32>
    %125 = vector.extract_strided_slice %121 {offsets = [0, 96], sizes = [16, 32], strides = [1, 1]} : vector<16x128xf32> to vector<16x32xf32>
    %126 = arith.mulf %123, %110 : vector<16x32xf32>
    %127 = arith.mulf %122, %125 : vector<16x32xf32>
    %128 = arith.addf %126, %127 : vector<16x32xf32>
    %129 = math.tanh %128 : vector<16x32xf32>
    %130 = arith.mulf %124, %129 : vector<16x32xf32>
    %cst_17 = arith.constant dense<0.000000e+00> : vector<16x256xf32>
    %131 = tpu.matmul %130, %8, %cst_17 {dimension_numbers = #tpu.dot_dimension_numbers<[1], [0], [0], [1], [0, 0, 1, 1], [], []>} : vector<16x32xf32>, vector<32x256xf32>, vector<16x256xf32> -> vector<16x256xf32>
    %132 = vector.extract_strided_slice %131 {offsets = [0, 0], sizes = [16, 128], strides = [1, 1]} : vector<16x256xf32> to vector<16x128xf32>
    %133 = vector.extract_strided_slice %131 {offsets = [0, 128], sizes = [16, 128], strides = [1, 1]} : vector<16x256xf32> to vector<16x128xf32>
    %134 = arith.select %11, %132, %133 : vector<16x128xi1>, vector<16x128xf32>
    %135 = vector.extract_strided_slice %7 {offsets = [96, 0], sizes = [16, 128], strides = [1, 1]} : vector<128x128xf32> to vector<16x128xf32>
    %136 = arith.addf %134, %135 : vector<16x128xf32>
    %137 = math.tanh %136 : vector<16x128xf32>
    %138 = arith.mulf %137, %17 : vector<16x128xf32>
    %139 = arith.addf %138, %20 : vector<16x128xf32>
    %140 = vector.extract_strided_slice %139 {offsets = [0, 0], sizes = [16, 32], strides = [1, 1]} : vector<16x128xf32> to vector<16x32xf32>
    %141 = vector.extract_strided_slice %139 {offsets = [0, 32], sizes = [16, 32], strides = [1, 1]} : vector<16x128xf32> to vector<16x32xf32>
    %142 = vector.extract_strided_slice %139 {offsets = [0, 64], sizes = [16, 32], strides = [1, 1]} : vector<16x128xf32> to vector<16x32xf32>
    %143 = vector.extract_strided_slice %139 {offsets = [0, 96], sizes = [16, 32], strides = [1, 1]} : vector<16x128xf32> to vector<16x32xf32>
    %144 = arith.mulf %141, %128 : vector<16x32xf32>
    %145 = arith.mulf %140, %143 : vector<16x32xf32>
    %146 = arith.addf %144, %145 : vector<16x32xf32>
    %147 = math.tanh %146 : vector<16x32xf32>
    %148 = arith.mulf %142, %147 : vector<16x32xf32>
    %cst_18 = arith.constant dense<0.000000e+00> : vector<16x256xf32>
    %149 = tpu.matmul %148, %8, %cst_18 {dimension_numbers = #tpu.dot_dimension_numbers<[1], [0], [0], [1], [0, 0, 1, 1], [], []>} : vector<16x32xf32>, vector<32x256xf32>, vector<16x256xf32> -> vector<16x256xf32>
    %150 = vector.extract_strided_slice %149 {offsets = [0, 0], sizes = [16, 128], strides = [1, 1]} : vector<16x256xf32> to vector<16x128xf32>
    %151 = vector.extract_strided_slice %149 {offsets = [0, 128], sizes = [16, 128], strides = [1, 1]} : vector<16x256xf32> to vector<16x128xf32>
    %152 = arith.select %11, %150, %151 : vector<16x128xi1>, vector<16x128xf32>
    %153 = vector.extract_strided_slice %7 {offsets = [112, 0], sizes = [16, 128], strides = [1, 1]} : vector<128x128xf32> to vector<16x128xf32>
    %154 = arith.addf %152, %153 : vector<16x128xf32>
    %155 = math.tanh %154 : vector<16x128xf32>
    %156 = arith.mulf %155, %17 : vector<16x128xf32>
    %157 = arith.addf %156, %20 : vector<16x128xf32>
    %158 = vector.extract_strided_slice %157 {offsets = [0, 0], sizes = [16, 32], strides = [1, 1]} : vector<16x128xf32> to vector<16x32xf32>
    %159 = vector.extract_strided_slice %157 {offsets = [0, 32], sizes = [16, 32], strides = [1, 1]} : vector<16x128xf32> to vector<16x32xf32>
    %160 = vector.extract_strided_slice %157 {offsets = [0, 64], sizes = [16, 32], strides = [1, 1]} : vector<16x128xf32> to vector<16x32xf32>
    %161 = vector.extract_strided_slice %157 {offsets = [0, 96], sizes = [16, 32], strides = [1, 1]} : vector<16x128xf32> to vector<16x32xf32>
    %162 = arith.mulf %159, %146 : vector<16x32xf32>
    %163 = arith.mulf %158, %161 : vector<16x32xf32>
    %164 = arith.addf %162, %163 : vector<16x32xf32>
    %165 = math.tanh %164 : vector<16x32xf32>
    %166 = arith.mulf %160, %165 : vector<16x32xf32>
    %c0_19 = arith.constant 0 : index
    %c0_20 = arith.constant 0 : index
    %167 = vector.load %arg3[%c0_19, %c0_20] : memref<64x128xf32, #tpu.memory_space<vmem>>, vector<64x128xf32>
    %168 = vector.extract_strided_slice %166 {offsets = [0, 0], sizes = [8, 32], strides = [1, 1]} : vector<16x32xf32> to vector<8x32xf32>
    %169 = vector.extract_strided_slice %167 {offsets = [0, 0], sizes = [32, 128], strides = [1, 1]} : vector<64x128xf32> to vector<32x128xf32>
    %cst_21 = arith.constant dense<0.000000e+00> : vector<8x128xf32>
    %170 = tpu.matmul %168, %169, %cst_21 {dimension_numbers = #tpu.dot_dimension_numbers<[1], [0], [0], [1], [0, 0, 1, 1], [], []>} : vector<8x32xf32>, vector<32x128xf32>, vector<8x128xf32> -> vector<8x128xf32>
    %171 = vector.extract_strided_slice %166 {offsets = [8, 0], sizes = [8, 32], strides = [1, 1]} : vector<16x32xf32> to vector<8x32xf32>
    %172 = vector.extract_strided_slice %167 {offsets = [32, 0], sizes = [32, 128], strides = [1, 1]} : vector<64x128xf32> to vector<32x128xf32>
    %cst_22 = arith.constant dense<0.000000e+00> : vector<8x128xf32>
    %173 = tpu.matmul %171, %172, %cst_22 {dimension_numbers = #tpu.dot_dimension_numbers<[1], [0], [0], [1], [0, 0, 1, 1], [], []>} : vector<8x32xf32>, vector<32x128xf32>, vector<8x128xf32> -> vector<8x128xf32>
    %174 = arith.addf %170, %173 : vector<8x128xf32>
    %c0_23 = arith.constant 0 : index
    %c0_24 = arith.constant 0 : index
    %175 = vector.load %arg4[%c0_23, %c0_24] : memref<1x128xf32, #tpu.memory_space<vmem>>, vector<1x128xf32>
    %176 = vector.broadcast %175 : vector<1x128xf32> to vector<8x128xf32>
    %177 = arith.addf %174, %176 : vector<8x128xf32>
    %c0_25 = arith.constant 0 : index
    %c0_26 = arith.constant 0 : index
    %178 = vector.load %arg5[%c0_25, %c0_26] : memref<8x128xf32, #tpu.memory_space<vmem>>, vector<8x128xf32>
    tpu.vector_store %arg5[%c0_25, %c0_26], %177 {strides = array<i32>} : memref<8x128xf32, #tpu.memory_space<vmem>>, vector<8x128xf32>,
    return
  }
}

</mosaic_0001>

<llo_original>
// kernel: tpu_custom_call.1
$region0: #{tpu_custom_call.1}
  #allocation0 [shape = 'u32[]', space=smem, size = 0x4, offset = 0x4, fixed_abs, tag = 'smem constant byte address 0x4 - core index']
  #allocation1 [shape = 'u32[144,128]{1,0:T(1,128)}', space=vmem, size = 0x12000, scoped, tag = 'internal scratch']
  %s0 = inlined_call_operand.vmem [shape: s32[128,1], index: 0, kind: input, shape index: {}]
  %s1 = inlined_call_operand.hbm [shape: f32[16,128], index: 1, kind: input, shape index: {}]
  %s2 = inlined_call_operand.vmem [shape: f32[32,256], index: 2, kind: input, shape index: {}]
  %s3 = inlined_call_operand.vmem [shape: f32[64,128], index: 3, kind: input, shape index: {}]
  %s4 = inlined_call_operand.vmem [shape: f32[1,128], index: 4, kind: input, shape index: {}]
  %s5 = inlined_call_operand.hbm [shape: f32[8,128], index: 5, kind: output, shape index: {}]
  %s6 = sld [smem:[#allocation0]]
  $region34: #{tpu_custom_call.1} parent=0
    _
  %s8 = ssub.s32 1, %s6
  %s9 = scalar_select 0, %s8, %s6
  $region1: #{tpu_custom_call.1} parent=0
    #allocation2 [shape = 'u8[8192]{0}', space=vmem, size = 0x2000, scoped, tag = 'input window, operand 1, single buffered']
    #allocation3 [shape = 's32[1]{0}', space=sflag, size = 0x4, scoped, tag = 'scoped memory for tpu_custom_call.1']
    #allocation4 [shape = 's32[1]{0}', space=sflag, size = 0x4, scoped, tag = 'scoped memory for tpu_custom_call.1']
    #allocation5 [shape = 'u8[4096]{0}', space=vmem, size = 0x1000, scoped, tag = 'output window, operand 0, single buffered']
    %10 = vsyncpa [#allocation3], 0
    %11 = vsyncpa [#allocation4], 0
    // Predicated region
    $region2: #{tpu_custom_call.1} parent=1 // pred_check
      _
    $region3: #{tpu_custom_call.1} parent=1 // pred_check_branch
      %13 = sbr.rel (0) target = $region5
    $region4: #{tpu_custom_call.1} parent=1 // pred_region
      _
    $region5: #{tpu_custom_call.1} parent=1 // pred_fallthru
      _
    // Predicated region
    $region6: #{tpu_custom_call.1} parent=1 // pred_check
      _
    $region7: #{tpu_custom_call.1} parent=1 // pred_check_branch
      %15 = sbr.rel (0) target = $region9
    $region8: #{tpu_custom_call.1} parent=1 // pred_region
      %s17 = ssub.s32 256, 256
      %18 = vsyncadd [#allocation3], %s17
      %s19 = sshll.u32 [#allocation2], 4
      %s20 = int_to_ptr.vmem [resolvable:$true] %s19
      %25 = dma.hbm_to_vmem [thread:$0]  %s1, 256, %s20, [#allocation3], 128, 128, 8
    $region9: #{tpu_custom_call.1} parent=1 // pred_fallthru
      _
    // Predicated region
    $region10: #{tpu_custom_call.1} parent=1 // pred_check
      _
    $region11: #{tpu_custom_call.1} parent=1 // pred_check_branch
      %27 = sbr.rel (0) target = $region13
    $region12: #{tpu_custom_call.1} parent=1 // pred_region
      _
    $region13: #{tpu_custom_call.1} parent=1 // pred_fallthru
      _
    // Predicated region
    $region14: #{tpu_custom_call.1} parent=1 // pred_check
      _
    $region15: #{tpu_custom_call.1} parent=1 // pred_check_branch
      %29 = sbr.rel (0) target = $region17
    $region16: #{tpu_custom_call.1} parent=1 // pred_region
      _
    $region17: #{tpu_custom_call.1} parent=1 // pred_fallthru
      _
    // Predicated region
    $region18: #{tpu_custom_call.1} parent=1 // pred_check
      _
    $region19: #{tpu_custom_call.1} parent=1 // pred_check_branch
      %31 = sbr.rel (0) target = $region21
    $region20: #{tpu_custom_call.1} parent=1 // pred_region
      _
    $region21: #{tpu_custom_call.1} parent=1 // pred_fallthru
      _
    // Predicated region
    $region22: #{tpu_custom_call.1} parent=1 // pred_check
      _
    $region23: #{tpu_custom_call.1} parent=1 // pred_check_branch
      %33 = sbr.rel (0) target = $region25
    $region24: #{tpu_custom_call.1} parent=1 // pred_region
      %34 = dma.done [#allocation3], 256
    $region25: #{tpu_custom_call.1} parent=1 // pred_fallthru
      _
    %v35 = vld [vmem:[%s0] sm:$0xff]
    %v36 = vld [vmem:[%s0 + $0x8] sm:$0xff]
    %v37 = vld [vmem:[%s0 + $0x10] sm:$0xff]
    %v38 = vld [vmem:[%s0 + $0x18] sm:$0xff]
    %v39 = vld [vmem:[%s0 + $0x20] sm:$0xff]
    %v40 = vld [vmem:[%s0 + $0x28] sm:$0xff]
    %v41 = vld [vmem:[%s0 + $0x30] sm:$0xff]
    %v42 = vld [vmem:[%s0 + $0x38] sm:$0xff]
    %v43 = vld [vmem:[%s0 + $0x40] sm:$0xff]
    %v44 = vld [vmem:[%s0 + $0x48] sm:$0xff]
    %v45 = vld [vmem:[%s0 + $0x50] sm:$0xff]
    %v46 = vld [vmem:[%s0 + $0x58] sm:$0xff]
    %v47 = vld [vmem:[%s0 + $0x60] sm:$0xff]
    %v48 = vld [vmem:[%s0 + $0x68] sm:$0xff]
    %v49 = vld [vmem:[%s0 + $0x70] sm:$0xff]
    %v50 = vld [vmem:[%s0 + $0x78] sm:$0xff]
    %v51 = vlaneseq
    %v52 = vand.u32 %v51, 127
    %53 = vset.pattern.permute.xlu0 0
    %54 = vperm.xlu0 %53, %v35
    %v55 = vpop.permute.xlu0 %54
    %56 = vset.pattern.permute.xlu0 0
    %57 = vperm.xlu0 %56, %v36
    %v58 = vpop.permute.xlu0 %57
    %59 = vset.pattern.permute.xlu0 0
    %60 = vperm.xlu0 %59, %v37
    %v61 = vpop.permute.xlu0 %60
    %62 = vset.pattern.permute.xlu0 0
    %63 = vperm.xlu0 %62, %v38
    %v64 = vpop.permute.xlu0 %63
    %65 = vset.pattern.permute.xlu0 0
    %66 = vperm.xlu0 %65, %v39
    %v67 = vpop.permute.xlu0 %66
    %68 = vset.pattern.permute.xlu0 0
    %69 = vperm.xlu0 %68, %v40
    %v70 = vpop.permute.xlu0 %69
    %71 = vset.pattern.permute.xlu0 0
    %72 = vperm.xlu0 %71, %v41
    %v73 = vpop.permute.xlu0 %72
    %74 = vset.pattern.permute.xlu0 0
    %75 = vperm.xlu0 %74, %v42
    %v76 = vpop.permute.xlu0 %75
    %77 = vset.pattern.permute.xlu0 0
    %78 = vperm.xlu0 %77, %v43
    %v79 = vpop.permute.xlu0 %78
    %80 = vset.pattern.permute.xlu0 0
    %81 = vperm.xlu0 %80, %v44
    %v82 = vpop.permute.xlu0 %81
    %83 = vset.pattern.permute.xlu0 0
    %84 = vperm.xlu0 %83, %v45
    %v85 = vpop.permute.xlu0 %84
    %86 = vset.pattern.permute.xlu0 0
    %87 = vperm.xlu0 %86, %v46
    %v88 = vpop.permute.xlu0 %87
    %89 = vset.pattern.permute.xlu0 0
    %90 = vperm.xlu0 %89, %v47
    %v91 = vpop.permute.xlu0 %90
    %92 = vset.pattern.permute.xlu0 0
    %93 = vperm.xlu0 %92, %v48
    %v94 = vpop.permute.xlu0 %93
    %95 = vset.pattern.permute.xlu0 0
    %96 = vperm.xlu0 %95, %v49
    %v97 = vpop.permute.xlu0 %96
    %98 = vset.pattern.permute.xlu0 0
    %99 = vperm.xlu0 %98, %v50
    %v100 = vpop.permute.xlu0 %99
    %vm101 = vcmp.eq.s32.totalorder %v55, %v52
    %vm102 = vcmp.eq.s32.totalorder %v58, %v52
    %vm103 = vcmp.eq.s32.totalorder %v61, %v52
    %vm104 = vcmp.eq.s32.totalorder %v64, %v52
    %vm105 = vcmp.eq.s32.totalorder %v67, %v52
    %vm106 = vcmp.eq.s32.totalorder %v70, %v52
    %vm107 = vcmp.eq.s32.totalorder %v73, %v52
    %vm108 = vcmp.eq.s32.totalorder %v76, %v52
    %vm109 = vcmp.eq.s32.totalorder %v79, %v52
    %vm110 = vcmp.eq.s32.totalorder %v82, %v52
    %vm111 = vcmp.eq.s32.totalorder %v85, %v52
    %vm112 = vcmp.eq.s32.totalorder %v88, %v52
    %vm113 = vcmp.eq.s32.totalorder %v91, %v52
    %vm114 = vcmp.eq.s32.totalorder %v94, %v52
    %vm115 = vcmp.eq.s32.totalorder %v97, %v52
    %vm116 = vcmp.eq.s32.totalorder %v100, %v52
    %v117 = vsel %vm101, 1, 0
    %v118 = vsel %vm102, 1, 0
    %v119 = vsel %vm103, 1, 0
    %v120 = vsel %vm104, 1, 0
    %v121 = vsel %vm105, 1, 0
    %v122 = vsel %vm106, 1, 0
    %v123 = vsel %vm107, 1, 0
    %v124 = vsel %vm108, 1, 0
    %v125 = vsel %vm109, 1, 0
    %v126 = vsel %vm110, 1, 0
    %v127 = vsel %vm111, 1, 0
    %v128 = vsel %vm112, 1, 0
    %v129 = vsel %vm113, 1, 0
    %v130 = vsel %vm114, 1, 0
    %v131 = vsel %vm115, 1, 0
    %v132 = vsel %vm116, 1, 0
    %v133 = vcvt.s32.f32 %v117
    %v134 = vcvt.s32.f32 %v118
    %v135 = vcvt.s32.f32 %v119
    %v136 = vcvt.s32.f32 %v120
    %v137 = vcvt.s32.f32 %v121
    %v138 = vcvt.s32.f32 %v122
    %v139 = vcvt.s32.f32 %v123
    %v140 = vcvt.s32.f32 %v124
    %v141 = vcvt.s32.f32 %v125
    %v142 = vcvt.s32.f32 %v126
    %v143 = vcvt.s32.f32 %v127
    %v144 = vcvt.s32.f32 %v128
    %v145 = vcvt.s32.f32 %v129
    %v146 = vcvt.s32.f32 %v130
    %v147 = vcvt.s32.f32 %v131
    %v148 = vcvt.s32.f32 %v132
    %v149 = vld [vmem:[#allocation2] sm:$0xff]
    %v150 = vld [vmem:[#allocation2 + $0x8] sm:$0xff]
    %vm151 = vcmask 130048
    %v153 = vsel %vm151, %v133, 0
    %v156 = vsel %vm151, %v134, 0
    %v159 = vsel %vm151, %v135, 0
    %v162 = vsel %vm151, %v136, 0
    %v165 = vsel %vm151, %v137, 0
    %v168 = vsel %vm151, %v138, 0
    %v171 = vsel %vm151, %v139, 0
    %v174 = vsel %vm151, %v140, 0
    %v177 = vsel %vm151, %v141, 0
    %v180 = vsel %vm151, %v142, 0
    %v183 = vsel %vm151, %v143, 0
    %v186 = vsel %vm151, %v144, 0
    %v189 = vsel %vm151, %v145, 0
    %v192 = vsel %vm151, %v146, 0
    %v195 = vsel %vm151, %v147, 0
    %v198 = vsel %vm151, %v148, 0
    %200 = vmatprep.subr.mxu0 0.0
    %201 = vmatpush1.msra.mxu0 %v149
    %202 = vmatprep.subr.mxu0 0.0
    %203 = vmatpush1.msra.mxu0 %v150
    %204 = vmatprep.subr.mxu0 0.0
    %205 = vmatpush1.msra.mxu0 0.0
    %206 = vmatprep.subr.mxu0 0.0
    %207 = vmatpush1.msra.mxu0 0.0
    %208 = vmatprep.subr.mxu0 0.0
    %209 = vmatpush1.msra.mxu0 0.0
    %210 = vmatprep.subr.mxu0 0.0
    %211 = vmatpush1.msra.mxu0 0.0
    %212 = vmatprep.subr.mxu0 0.0
    %213 = vmatpush1.msra.mxu0 0.0
    %214 = vmatprep.subr.mxu0 0.0
    %215 = vmatpush1.msra.mxu0 0.0
    %216 = vmatprep.subr.mxu0 0.0
    %217 = vmatpush1.msra.mxu0 0.0
    %218 = vmatprep.subr.mxu0 0.0
    %219 = vmatpush1.msra.mxu0 0.0
    %220 = vmatprep.subr.mxu0 0.0
    %221 = vmatpush1.msra.mxu0 0.0
    %222 = vmatprep.subr.mxu0 0.0
    %223 = vmatpush1.msra.mxu0 0.0
    %224 = vmatprep.subr.mxu0 0.0
    %225 = vmatpush1.msra.mxu0 0.0
    %226 = vmatprep.subr.mxu0 0.0
    %227 = vmatpush1.msra.mxu0 0.0
    %228 = vmatprep.subr.mxu0 0.0
    %229 = vmatpush1.msra.mxu0 0.0
    %230 = vmatprep.subr.mxu0 0.0
    %231 = vmatpush1.msra.mxu0 0.0
    %232 = vmatprep.subr.mxu0 0.0
    %233 = vmatpush1.msra.mxu0 0.0
    %234 = vmatprep.subr.mxu0 0.0
    %235 = vmatpush1.msra.mxu0 0.0
    %236 = vmatprep.subr.mxu0 0.0
    %237 = vmatpush1.msra.mxu0 0.0
    %238 = vmatprep.subr.mxu0 0.0
    %239 = vmatpush1.msra.mxu0 0.0
    %240 = vmatprep.subr.mxu0 0.0
    %241 = vmatpush1.msra.mxu0 0.0
    %242 = vmatprep.subr.mxu0 0.0
    %243 = vmatpush1.msra.mxu0 0.0
    %244 = vmatprep.subr.mxu0 0.0
    %245 = vmatpush1.msra.mxu0 0.0
    %246 = vmatprep.subr.mxu0 0.0
    %247 = vmatpush1.msra.mxu0 0.0
    %248 = vmatprep.subr.mxu0 0.0
    %249 = vmatpush1.msra.mxu0 0.0
    %250 = vmatprep.subr.mxu0 0.0
    %251 = vmatpush1.msra.mxu0 0.0
    %252 = vmatprep.subr.mxu0 0.0
    %253 = vmatpush1.msra.mxu0 0.0
    %254 = vmatprep.subr.mxu0 0.0
    %255 = vmatpush1.msra.mxu0 0.0
    %256 = vmatprep.subr.mxu0 0.0
    %257 = vmatpush1.msra.mxu0 0.0
    %258 = vmatprep.subr.mxu0 0.0
    %259 = vmatpush1.msra.mxu0 0.0
    %260 = vmatprep.subr.mxu0 0.0
    %261 = vmatpush1.msra.mxu0 0.0
    %262 = vmatprep.subr.mxu0 0.0
    %263 = vmatpush1.msra.mxu0 0.0
    %264 = vmatprep.mubr.f32.mxu0 0.0
    %265 = vmatmul.mubr.f32.gmra.mrb[0].mxu0 %v153
    %v266 = vpop.f32.mrb[0].mxu0
    %v267 = vadd.f32 0.0, %v266
    %v268 = vpop.f32.mrb[0].mxu0
    %269 = vmatprep.mubr.f32.mxu0 0.0
    %270 = vmatmul.mubr.f32.gmra.mrb[0].mxu0 %v156
    %v271 = vpop.f32.mrb[0].mxu0
    %v272 = vadd.f32 0.0, %v271
    %v273 = vpop.f32.mrb[0].mxu0
    %274 = vmatprep.mubr.f32.mxu0 0.0
    %275 = vmatmul.mubr.f32.gmra.mrb[0].mxu0 %v159
    %v276 = vpop.f32.mrb[0].mxu0
    %v277 = vadd.f32 0.0, %v276
    %v278 = vpop.f32.mrb[0].mxu0
    %279 = vmatprep.mubr.f32.mxu0 0.0
    %280 = vmatmul.mubr.f32.gmra.mrb[0].mxu0 %v162
    %v281 = vpop.f32.mrb[0].mxu0
    %v282 = vadd.f32 0.0, %v281
    %v283 = vpop.f32.mrb[0].mxu0
    %284 = vmatprep.mubr.f32.mxu0 0.0
    %285 = vmatmul.mubr.f32.gmra.mrb[0].mxu0 %v165
    %v286 = vpop.f32.mrb[0].mxu0
    %v287 = vadd.f32 0.0, %v286
    %v288 = vpop.f32.mrb[0].mxu0
    %289 = vmatprep.mubr.f32.mxu0 0.0
    %290 = vmatmul.mubr.f32.gmra.mrb[0].mxu0 %v168
    %v291 = vpop.f32.mrb[0].mxu0
    %v292 = vadd.f32 0.0, %v291
    %v293 = vpop.f32.mrb[0].mxu0
    %294 = vmatprep.mubr.f32.mxu0 0.0
    %295 = vmatmul.mubr.f32.gmra.mrb[0].mxu0 %v171
    %v296 = vpop.f32.mrb[0].mxu0
    %v297 = vadd.f32 0.0, %v296
    %v298 = vpop.f32.mrb[0].mxu0
    %299 = vmatprep.mubr.f32.mxu0 0.0
    %300 = vmatmul.mubr.f32.gmra.mrb[0].mxu0 %v174
    %v301 = vpop.f32.mrb[0].mxu0
    %v302 = vadd.f32 0.0, %v301
    %v303 = vpop.f32.mrb[0].mxu0
    %304 = vmatprep.mubr.f32.mxu0 0.0
    %305 = vmatmul.mubr.f32.gmra.mrb[0].mxu0 %v177
    %v306 = vpop.f32.mrb[0].mxu0
    %v307 = vadd.f32 0.0, %v306
    %v308 = vpop.f32.mrb[0].mxu0
    %309 = vmatprep.mubr.f32.mxu0 0.0
    %310 = vmatmul.mubr.f32.gmra.mrb[0].mxu0 %v180
    %v311 = vpop.f32.mrb[0].mxu0
    %v312 = vadd.f32 0.0, %v311
    %v313 = vpop.f32.mrb[0].mxu0
    %314 = vmatprep.mubr.f32.mxu0 0.0
    %315 = vmatmul.mubr.f32.gmra.mrb[0].mxu0 %v183
    %v316 = vpop.f32.mrb[0].mxu0
    %v317 = vadd.f32 0.0, %v316
    %v318 = vpop.f32.mrb[0].mxu0
    %319 = vmatprep.mubr.f32.mxu0 0.0
    %320 = vmatmul.mubr.f32.gmra.mrb[0].mxu0 %v186
    %v321 = vpop.f32.mrb[0].mxu0
    %v322 = vadd.f32 0.0, %v321
    %v323 = vpop.f32.mrb[0].mxu0
    %324 = vmatprep.mubr.f32.mxu0 0.0
    %325 = vmatmul.mubr.f32.gmra.mrb[0].mxu0 %v189
    %v326 = vpop.f32.mrb[0].mxu0
    %v327 = vadd.f32 0.0, %v326
    %v328 = vpop.f32.mrb[0].mxu0
    %329 = vmatprep.mubr.f32.mxu0 0.0
    %330 = vmatmul.mubr.f32.gmra.mrb[0].mxu0 %v192
    %v331 = vpop.f32.mrb[0].mxu0
    %v332 = vadd.f32 0.0, %v331
    %v333 = vpop.f32.mrb[0].mxu0
    %334 = vmatprep.mubr.f32.mxu0 0.0
    %335 = vmatmul.mubr.f32.gmra.mrb[0].mxu0 %v195
    %v336 = vpop.f32.mrb[0].mxu0
    %v337 = vadd.f32 0.0, %v336
    %v338 = vpop.f32.mrb[0].mxu0
    %339 = vmatprep.mubr.f32.mxu0 0.0
    %340 = vmatmul.mubr.f32.gmra.mrb[0].mxu0 %v198
    %v341 = vpop.f32.mrb[0].mxu0
    %v342 = vadd.f32 0.0, %v341
    %v343 = vpop.f32.mrb[0].mxu0
    %344 = vdwg.mxu0
    %v345 = vld [vmem:[%s2] sm:$0xff]
    %v346 = vld [vmem:[%s2 + $0x8] sm:$0xff]
    %v347 = vld [vmem:[%s2 + $0x10] sm:$0xff]
    %v348 = vld [vmem:[%s2 + $0x18] sm:$0xff]
    %v349 = vld [vmem:[%s2 + $0x20] sm:$0xff]
    %v350 = vld [vmem:[%s2 + $0x28] sm:$0xff]
    %v351 = vld [vmem:[%s2 + $0x30] sm:$0xff]
    %v352 = vld [vmem:[%s2 + $0x38] sm:$0xff]
    %v353 = vlaneseq
    %v354 = vshrl.u32 %v353, 7
    %v355 = vadd.s32 %v354, 8
    %vm356 = vcmp.lt.s32.totalorder %v354, 8
    %vm357 = vcmp.lt.s32.totalorder %v355, 8
    %vm358 = vcmp.lt.s32.totalorder %v52, 96
    %v359 = vsel %vm358, 0.5, 1.0
    %v360 = vsel %vm358, 0.5, 0.0
    %vm361 = vcmask 261120
    %v363 = vsel %vm361, 0.0, 0
    %365 = vmatprep.subr.mxu0 %v346
    %366 = vmatpush1.msra.mxu0 %v345
    %367 = vmatprep.subr.mxu0 %v348
    %368 = vmatpush1.msra.mxu0 %v347
    %369 = vmatprep.subr.mxu0 %v350
    %370 = vmatpush1.msra.mxu0 %v349
    %371 = vmatprep.subr.mxu0 %v352
    %372 = vmatpush1.msra.mxu0 %v351
    %373 = vmatprep.subr.mxu0 0.0
    %374 = vmatpush1.msra.mxu0 0.0
    %375 = vmatprep.subr.mxu0 0.0
    %376 = vmatpush1.msra.mxu0 0.0
    %377 = vmatprep.subr.mxu0 0.0
    %378 = vmatpush1.msra.mxu0 0.0
    %379 = vmatprep.subr.mxu0 0.0
    %380 = vmatpush1.msra.mxu0 0.0
    %381 = vmatprep.subr.mxu0 0.0
    %382 = vmatpush1.msra.mxu0 0.0
    %383 = vmatprep.subr.mxu0 0.0
    %384 = vmatpush1.msra.mxu0 0.0
    %385 = vmatprep.subr.mxu0 0.0
    %386 = vmatpush1.msra.mxu0 0.0
    %387 = vmatprep.subr.mxu0 0.0
    %388 = vmatpush1.msra.mxu0 0.0
    %389 = vmatprep.subr.mxu0 0.0
    %390 = vmatpush1.msra.mxu0 0.0
    %391 = vmatprep.subr.mxu0 0.0
    %392 = vmatpush1.msra.mxu0 0.0
    %393 = vmatprep.subr.mxu0 0.0
    %394 = vmatpush1.msra.mxu0 0.0
    %395 = vmatprep.subr.mxu0 0.0
    %396 = vmatpush1.msra.mxu0 0.0
    %397 = vmatprep.subr.mxu0 0.0
    %398 = vmatpush1.msra.mxu0 0.0
    %399 = vmatprep.subr.mxu0 0.0
    %400 = vmatpush1.msra.mxu0 0.0
    %401 = vmatprep.subr.mxu0 0.0
    %402 = vmatpush1.msra.mxu0 0.0
    %403 = vmatprep.subr.mxu0 0.0
    %404 = vmatpush1.msra.mxu0 0.0
    %405 = vmatprep.subr.mxu0 0.0
    %406 = vmatpush1.msra.mxu0 0.0
    %407 = vmatprep.subr.mxu0 0.0
    %408 = vmatpush1.msra.mxu0 0.0
    %409 = vmatprep.subr.mxu0 0.0
    %410 = vmatpush1.msra.mxu0 0.0
    %411 = vmatprep.subr.mxu0 0.0
    %412 = vmatpush1.msra.mxu0 0.0
    %413 = vmatprep.subr.mxu0 0.0
    %414 = vmatpush1.msra.mxu0 0.0
    %415 = vmatprep.subr.mxu0 0.0
    %416 = vmatpush1.msra.mxu0 0.0
    %417 = vmatprep.subr.mxu0 0.0
    %418 = vmatpush1.msra.mxu0 0.0
    %419 = vmatprep.subr.mxu0 0.0
    %420 = vmatpush1.msra.mxu0 0.0
    %421 = vmatprep.subr.mxu0 0.0
    %422 = vmatpush1.msra.mxu0 0.0
    %423 = vmatprep.subr.mxu0 0.0
    %424 = vmatpush1.msra.mxu0 0.0
    %425 = vmatprep.subr.mxu0 0.0
    %426 = vmatpush1.msra.mxu0 0.0
    %427 = vmatprep.subr.mxu0 0.0
    %428 = vmatpush1.msra.mxu0 0.0
    %429 = vmatprep.mubr.f32.mxu0 0.0
    %430 = vmatmul.mubr.f32.gmra.mrb[0].mxu0 %v363
    %v431 = vpop.f32.mrb[0].mxu0
    %v432 = vadd.f32 0.0, %v431
    %v433 = vpop.f32.mrb[0].mxu0
    %v434 = vadd.f32 0.0, %v433
    %435 = vmatprep.mubr.f32.mxu0 0.0
    %436 = vmatmul.mubr.f32.gmra.mrb[0].mxu0 %v363
    %v437 = vpop.f32.mrb[0].mxu0
    %v438 = vadd.f32 0.0, %v437
    %v439 = vpop.f32.mrb[0].mxu0
    %v440 = vadd.f32 0.0, %v439
    %441 = vdwg.mxu0
    %v442 = vsel %vm356, %v432, %v434
    %v443 = vsel %vm357, %v438, %v440
    %v444 = vadd.f32 %v442, %v267
    %v445 = vadd.f32 %v443, %v272
    %v446 = vtanh.pop %v444
    %v447 = vtanh.pop %v445
    %v448 = vmul.f32 %v446, %v359
    %v449 = vmul.f32 %v447, %v359
    %v450 = vadd.f32 %v448, %v360
    %v451 = vadd.f32 %v449, %v360
    %v452 = vmul.f32 %v450, 0.0
    %v453 = vmul.f32 %v451, 0.0
    %456 = vrot.lane.b32.xlu0 %v450, 32
    %v457 = vpop.permute.xlu0 %456
    %458 = vrot.lane.b32.xlu0 %v451, 32
    %v459 = vpop.permute.xlu0 %458
    %v462 = vmul.f32 %v450, %v457
    %v463 = vmul.f32 %v451, %v459
    %466 = vrot.lane.b32.xlu0 %v462, 32
    %v467 = vpop.permute.xlu0 %466
    %468 = vrot.lane.b32.xlu0 %v463, 32
    %v469 = vpop.permute.xlu0 %468
    %v472 = vadd.f32 %v452, %v467
    %v473 = vadd.f32 %v453, %v469
    %v474 = vtanh.pop %v472
    %v475 = vtanh.pop %v473
    %478 = vrot.lane.b32.xlu0 %v474, 32
    %v479 = vpop.permute.xlu0 %478
    %480 = vrot.lane.b32.xlu0 %v475, 32
    %v481 = vpop.permute.xlu0 %480
    %v484 = vmul.f32 %v450, %v479
    %v485 = vmul.f32 %v451, %v481
    %488 = vrot.lane.b32.xlu0 %v484, 64
    %v489 = vpop.permute.xlu0 %488
    %490 = vrot.lane.b32.xlu0 %v485, 64
    %v491 = vpop.permute.xlu0 %490
    %v492 = vsel %vm361, %v489, 0
    %v494 = vsel %vm361, %v491, 0
    %496 = vmatprep.subr.mxu0 %v346
    %497 = vmatpush1.msra.mxu0 %v345
    %498 = vmatprep.subr.mxu0 %v348
    %499 = vmatpush1.msra.mxu0 %v347
    %500 = vmatprep.subr.mxu0 %v350
    %501 = vmatpush1.msra.mxu0 %v349
    %502 = vmatprep.subr.mxu0 %v352
    %503 = vmatpush1.msra.mxu0 %v351
    %504 = vmatprep.subr.mxu0 0.0
    %505 = vmatpush1.msra.mxu0 0.0
    %506 = vmatprep.subr.mxu0 0.0
    %507 = vmatpush1.msra.mxu0 0.0
    %508 = vmatprep.subr.mxu0 0.0
    %509 = vmatpush1.msra.mxu0 0.0
    %510 = vmatprep.subr.mxu0 0.0
    %511 = vmatpush1.msra.mxu0 0.0
    %512 = vmatprep.subr.mxu0 0.0
    %513 = vmatpush1.msra.mxu0 0.0
    %514 = vmatprep.subr.mxu0 0.0
    %515 = vmatpush1.msra.mxu0 0.0
    %516 = vmatprep.subr.mxu0 0.0
    %517 = vmatpush1.msra.mxu0 0.0
    %518 = vmatprep.subr.mxu0 0.0
    %519 = vmatpush1.msra.mxu0 0.0
    %520 = vmatprep.subr.mxu0 0.0
    %521 = vmatpush1.msra.mxu0 0.0
    %522 = vmatprep.subr.mxu0 0.0
    %523 = vmatpush1.msra.mxu0 0.0
    %524 = vmatprep.subr.mxu0 0.0
    %525 = vmatpush1.msra.mxu0 0.0
    %526 = vmatprep.subr.mxu0 0.0
    %527 = vmatpush1.msra.mxu0 0.0
    %528 = vmatprep.subr.mxu0 0.0
    %529 = vmatpush1.msra.mxu0 0.0
    %530 = vmatprep.subr.mxu0 0.0
    %531 = vmatpush1.msra.mxu0 0.0
    %532 = vmatprep.subr.mxu0 0.0
    %533 = vmatpush1.msra.mxu0 0.0
    %534 = vmatprep.subr.mxu0 0.0
    %535 = vmatpush1.msra.mxu0 0.0
    %536 = vmatprep.subr.mxu0 0.0
    %537 = vmatpush1.msra.mxu0 0.0
    %538 = vmatprep.subr.mxu0 0.0
    %539 = vmatpush1.msra.mxu0 0.0
    %540 = vmatprep.subr.mxu0 0.0
    %541 = vmatpush1.msra.mxu0 0.0
    %542 = vmatprep.subr.mxu0 0.0
    %543 = vmatpush1.msra.mxu0 0.0
    %544 = vmatprep.subr.mxu0 0.0
    %545 = vmatpush1.msra.mxu0 0.0
    %546 = vmatprep.subr.mxu0 0.0
    %547 = vmatpush1.msra.mxu0 0.0
    %548 = vmatprep.subr.mxu0 0.0
    %549 = vmatpush1.msra.mxu0 0.0
    %550 = vmatprep.subr.mxu0 0.0
    %551 = vmatpush1.msra.mxu0 0.0
    %552 = vmatprep.subr.mxu0 0.0
    %553 = vmatpush1.msra.mxu0 0.0
    %554 = vmatprep.subr.mxu0 0.0
    %555 = vmatpush1.msra.mxu0 0.0
    %556 = vmatprep.subr.mxu0 0.0
    %557 = vmatpush1.msra.mxu0 0.0
    %558 = vmatprep.subr.mxu0 0.0
    %559 = vmatpush1.msra.mxu0 0.0
    %560 = vmatprep.mubr.f32.mxu0 0.0
    %561 = vmatmul.mubr.f32.gmra.mrb[0].mxu0 %v492
    %v562 = vpop.f32.mrb[0].mxu0
    %v563 = vadd.f32 0.0, %v562
    %v564 = vpop.f32.mrb[0].mxu0
    %v565 = vadd.f32 0.0, %v564
    %566 = vmatprep.mubr.f32.mxu0 0.0
    %567 = vmatmul.mubr.f32.gmra.mrb[0].mxu0 %v494
    %v568 = vpop.f32.mrb[0].mxu0
    %v569 = vadd.f32 0.0, %v568
    %v570 = vpop.f32.mrb[0].mxu0
    %v571 = vadd.f32 0.0, %v570
    %572 = vdwg.mxu0
    %v573 = vsel %vm356, %v563, %v565
    %v574 = vsel %vm357, %v569, %v571
    %v575 = vadd.f32 %v573, %v277
    %v576 = vadd.f32 %v574, %v282
    %v577 = vtanh.pop %v575
    %v578 = vtanh.pop %v576
    %v579 = vmul.f32 %v577, %v359
    %v580 = vmul.f32 %v578, %v359
    %v581 = vadd.f32 %v579, %v360
    %v582 = vadd.f32 %v580, %v360
    %v583 = vmul.f32 %v581, %v472
    %v584 = vmul.f32 %v582, %v473
    %587 = vrot.lane.b32.xlu0 %v581, 32
    %v588 = vpop.permute.xlu0 %587
    %589 = vrot.lane.b32.xlu0 %v582, 32
    %v590 = vpop.permute.xlu0 %589
    %v593 = vmul.f32 %v581, %v588
    %v594 = vmul.f32 %v582, %v590
    %597 = vrot.lane.b32.xlu0 %v593, 32
    %v598 = vpop.permute.xlu0 %597
    %599 = vrot.lane.b32.xlu0 %v594, 32
    %v600 = vpop.permute.xlu0 %599
    %v603 = vadd.f32 %v583, %v598
    %v604 = vadd.f32 %v584, %v600
    %v605 = vtanh.pop %v603
    %v606 = vtanh.pop %v604
    %609 = vrot.lane.b32.xlu0 %v605, 32
    %v610 = vpop.permute.xlu0 %609
    %611 = vrot.lane.b32.xlu0 %v606, 32
    %v612 = vpop.permute.xlu0 %611
    %v615 = vmul.f32 %v581, %v610
    %v616 = vmul.f32 %v582, %v612
    %619 = vrot.lane.b32.xlu0 %v615, 64
    %v620 = vpop.permute.xlu0 %619
    %621 = vrot.lane.b32.xlu0 %v616, 64
    %v622 = vpop.permute.xlu0 %621
    %v623 = vsel %vm361, %v620, 0
    %v625 = vsel %vm361, %v622, 0
    %627 = vmatprep.subr.mxu0 %v346
    %628 = vmatpush1.msra.mxu0 %v345
    %629 = vmatprep.subr.mxu0 %v348
    %630 = vmatpush1.msra.mxu0 %v347
    %631 = vmatprep.subr.mxu0 %v350
    %632 = vmatpush1.msra.mxu0 %v349
    %633 = vmatprep.subr.mxu0 %v352
    %634 = vmatpush1.msra.mxu0 %v351
    %635 = vmatprep.subr.mxu0 0.0
    %636 = vmatpush1.msra.mxu0 0.0
    %637 = vmatprep.subr.mxu0 0.0
    %638 = vmatpush1.msra.mxu0 0.0
    %639 = vmatprep.subr.mxu0 0.0
    %640 = vmatpush1.msra.mxu0 0.0
    %641 = vmatprep.subr.mxu0 0.0
    %642 = vmatpush1.msra.mxu0 0.0
    %643 = vmatprep.subr.mxu0 0.0
    %644 = vmatpush1.msra.mxu0 0.0
    %645 = vmatprep.subr.mxu0 0.0
    %646 = vmatpush1.msra.mxu0 0.0
    %647 = vmatprep.subr.mxu0 0.0
    %648 = vmatpush1.msra.mxu0 0.0
    %649 = vmatprep.subr.mxu0 0.0
    %650 = vmatpush1.msra.mxu0 0.0
    %651 = vmatprep.subr.mxu0 0.0
    %652 = vmatpush1.msra.mxu0 0.0
    %653 = vmatprep.subr.mxu0 0.0
    %654 = vmatpush1.msra.mxu0 0.0
    %655 = vmatprep.subr.mxu0 0.0
    %656 = vmatpush1.msra.mxu0 0.0
    %657 = vmatprep.subr.mxu0 0.0
    %658 = vmatpush1.msra.mxu0 0.0
    %659 = vmatprep.subr.mxu0 0.0
    %660 = vmatpush1.msra.mxu0 0.0
    %661 = vmatprep.subr.mxu0 0.0
    %662 = vmatpush1.msra.mxu0 0.0
    %663 = vmatprep.subr.mxu0 0.0
    %664 = vmatpush1.msra.mxu0 0.0
    %665 = vmatprep.subr.mxu0 0.0
    %666 = vmatpush1.msra.mxu0 0.0
    %667 = vmatprep.subr.mxu0 0.0
    %668 = vmatpush1.msra.mxu0 0.0
    %669 = vmatprep.subr.mxu0 0.0
    %670 = vmatpush1.msra.mxu0 0.0
    %671 = vmatprep.subr.mxu0 0.0
    %672 = vmatpush1.msra.mxu0 0.0
    %673 = vmatprep.subr.mxu0 0.0
    %674 = vmatpush1.msra.mxu0 0.0
    %675 = vmatprep.subr.mxu0 0.0
    %676 = vmatpush1.msra.mxu0 0.0
    %677 = vmatprep.subr.mxu0 0.0
    %678 = vmatpush1.msra.mxu0 0.0
    %679 = vmatprep.subr.mxu0 0.0
    %680 = vmatpush1.msra.mxu0 0.0
    %681 = vmatprep.subr.mxu0 0.0
    %682 = vmatpush1.msra.mxu0 0.0
    %683 = vmatprep.subr.mxu0 0.0
    %684 = vmatpush1.msra.mxu0 0.0
    %685 = vmatprep.subr.mxu0 0.0
    %686 = vmatpush1.msra.mxu0 0.0
    %687 = vmatprep.subr.mxu0 0.0
    %688 = vmatpush1.msra.mxu0 0.0
    %689 = vmatprep.subr.mxu0 0.0
    %690 = vmatpush1.msra.mxu0 0.0
    %691 = vmatprep.mubr.f32.mxu0 0.0
    %692 = vmatmul.mubr.f32.gmra.mrb[0].mxu0 %v623
    %v693 = vpop.f32.mrb[0].mxu0
    %v694 = vadd.f32 0.0, %v693
    %v695 = vpop.f32.mrb[0].mxu0
    %v696 = vadd.f32 0.0, %v695
    %697 = vmatprep.mubr.f32.mxu0 0.0
    %698 = vmatmul.mubr.f32.gmra.mrb[0].mxu0 %v625
    %v699 = vpop.f32.mrb[0].mxu0
    %v700 = vadd.f32 0.0, %v699
    %v701 = vpop.f32.mrb[0].mxu0
    %v702 = vadd.f32 0.0, %v701
    %703 = vdwg.mxu0
    %v704 = vsel %vm356, %v694, %v696
    %v705 = vsel %vm357, %v700, %v702
    %v706 = vadd.f32 %v704, %v287
    %v707 = vadd.f32 %v705, %v292
    %v708 = vtanh.pop %v706
    %v709 = vtanh.pop %v707
    %v710 = vmul.f32 %v708, %v359
    %v711 = vmul.f32 %v709, %v359
    %v712 = vadd.f32 %v710, %v360
    %v713 = vadd.f32 %v711, %v360
    %v714 = vmul.f32 %v712, %v603
    %v715 = vmul.f32 %v713, %v604
    %718 = vrot.lane.b32.xlu0 %v712, 32
    %v719 = vpop.permute.xlu0 %718
    %720 = vrot.lane.b32.xlu0 %v713, 32
    %v721 = vpop.permute.xlu0 %720
    %v724 = vmul.f32 %v712, %v719
    %v725 = vmul.f32 %v713, %v721
    %728 = vrot.lane.b32.xlu0 %v724, 32
    %v729 = vpop.permute.xlu0 %728
    %730 = vrot.lane.b32.xlu0 %v725, 32
    %v731 = vpop.permute.xlu0 %730
    %v734 = vadd.f32 %v714, %v729
    %v735 = vadd.f32 %v715, %v731
    %v736 = vtanh.pop %v734
    %v737 = vtanh.pop %v735
    %740 = vrot.lane.b32.xlu0 %v736, 32
    %v741 = vpop.permute.xlu0 %740
    %742 = vrot.lane.b32.xlu0 %v737, 32
    %v743 = vpop.permute.xlu0 %742
    %v746 = vmul.f32 %v712, %v741
    %v747 = vmul.f32 %v713, %v743
    %750 = vrot.lane.b32.xlu0 %v746, 64
    %v751 = vpop.permute.xlu0 %750
    %752 = vrot.lane.b32.xlu0 %v747, 64
    %v753 = vpop.permute.xlu0 %752
    %v754 = vsel %vm361, %v751, 0
    %v756 = vsel %vm361, %v753, 0
    %758 = vmatprep.subr.mxu0 %v346
    %759 = vmatpush1.msra.mxu0 %v345
    %760 = vmatprep.subr.mxu0 %v348
    %761 = vmatpush1.msra.mxu0 %v347
    %762 = vmatprep.subr.mxu0 %v350
    %763 = vmatpush1.msra.mxu0 %v349
    %764 = vmatprep.subr.mxu0 %v352
    %765 = vmatpush1.msra.mxu0 %v351
    %766 = vmatprep.subr.mxu0 0.0
    %767 = vmatpush1.msra.mxu0 0.0
    %768 = vmatprep.subr.mxu0 0.0
    %769 = vmatpush1.msra.mxu0 0.0
    %770 = vmatprep.subr.mxu0 0.0
    %771 = vmatpush1.msra.mxu0 0.0
    %772 = vmatprep.subr.mxu0 0.0
    %773 = vmatpush1.msra.mxu0 0.0
    %774 = vmatprep.subr.mxu0 0.0
    %775 = vmatpush1.msra.mxu0 0.0
    %776 = vmatprep.subr.mxu0 0.0
    %777 = vmatpush1.msra.mxu0 0.0
    %778 = vmatprep.subr.mxu0 0.0
    %779 = vmatpush1.msra.mxu0 0.0
    %780 = vmatprep.subr.mxu0 0.0
    %781 = vmatpush1.msra.mxu0 0.0
    %782 = vmatprep.subr.mxu0 0.0
    %783 = vmatpush1.msra.mxu0 0.0
    %784 = vmatprep.subr.mxu0 0.0
    %785 = vmatpush1.msra.mxu0 0.0
    %786 = vmatprep.subr.mxu0 0.0
    %787 = vmatpush1.msra.mxu0 0.0
    %788 = vmatprep.subr.mxu0 0.0
    %789 = vmatpush1.msra.mxu0 0.0
    %790 = vmatprep.subr.mxu0 0.0
    %791 = vmatpush1.msra.mxu0 0.0
    %792 = vmatprep.subr.mxu0 0.0
    %793 = vmatpush1.msra.mxu0 0.0
    %794 = vmatprep.subr.mxu0 0.0
    %795 = vmatpush1.msra.mxu0 0.0
    %796 = vmatprep.subr.mxu0 0.0
    %797 = vmatpush1.msra.mxu0 0.0
    %798 = vmatprep.subr.mxu0 0.0
    %799 = vmatpush1.msra.mxu0 0.0
    %800 = vmatprep.subr.mxu0 0.0
    %801 = vmatpush1.msra.mxu0 0.0
    %802 = vmatprep.subr.mxu0 0.0
    %803 = vmatpush1.msra.mxu0 0.0
    %804 = vmatprep.subr.mxu0 0.0
    %805 = vmatpush1.msra.mxu0 0.0
    %806 = vmatprep.subr.mxu0 0.0
    %807 = vmatpush1.msra.mxu0 0.0
    %808 = vmatprep.subr.mxu0 0.0
    %809 = vmatpush1.msra.mxu0 0.0
    %810 = vmatprep.subr.mxu0 0.0
    %811 = vmatpush1.msra.mxu0 0.0
    %812 = vmatprep.subr.mxu0 0.0
    %813 = vmatpush1.msra.mxu0 0.0
    %814 = vmatprep.subr.mxu0 0.0
    %815 = vmatpush1.msra.mxu0 0.0
    %816 = vmatprep.subr.mxu0 0.0
    %817 = vmatpush1.msra.mxu0 0.0
    %818 = vmatprep.subr.mxu0 0.0
    %819 = vmatpush1.msra.mxu0 0.0
    %820 = vmatprep.subr.mxu0 0.0
    %821 = vmatpush1.msra.mxu0 0.0
    %822 = vmatprep.mubr.f32.mxu0 0.0
    %823 = vmatmul.mubr.f32.gmra.mrb[0].mxu0 %v754
    %v824 = vpop.f32.mrb[0].mxu0
    %v825 = vadd.f32 0.0, %v824
    %v826 = vpop.f32.mrb[0].mxu0
    %v827 = vadd.f32 0.0, %v826
    %828 = vmatprep.mubr.f32.mxu0 0.0
    %829 = vmatmul.mubr.f32.gmra.mrb[0].mxu0 %v756
    %v830 = vpop.f32.mrb[0].mxu0
    %v831 = vadd.f32 0.0, %v830
    %v832 = vpop.f32.mrb[0].mxu0
    %v833 = vadd.f32 0.0, %v832
    %834 = vdwg.mxu0
    %v835 = vsel %vm356, %v825, %v827
    %v836 = vsel %vm357, %v831, %v833
    %v837 = vadd.f32 %v835, %v297
    %v838 = vadd.f32 %v836, %v302
    %v839 = vtanh.pop %v837
    %v840 = vtanh.pop %v838
    %v841 = vmul.f32 %v839, %v359
    %v842 = vmul.f32 %v840, %v359
    %v843 = vadd.f32 %v841, %v360
    %v844 = vadd.f32 %v842, %v360
    %v845 = vmul.f32 %v843, %v734
    %v846 = vmul.f32 %v844, %v735
    %849 = vrot.lane.b32.xlu0 %v843, 32
    %v850 = vpop.permute.xlu0 %849
    %851 = vrot.lane.b32.xlu0 %v844, 32
    %v852 = vpop.permute.xlu0 %851
    %v855 = vmul.f32 %v843, %v850
    %v856 = vmul.f32 %v844, %v852
    %859 = vrot.lane.b32.xlu0 %v855, 32
    %v860 = vpop.permute.xlu0 %859
    %861 = vrot.lane.b32.xlu0 %v856, 32
    %v862 = vpop.permute.xlu0 %861
    %v865 = vadd.f32 %v845, %v860
    %v866 = vadd.f32 %v846, %v862
    %v867 = vtanh.pop %v865
    %v868 = vtanh.pop %v866
    %871 = vrot.lane.b32.xlu0 %v867, 32
    %v872 = vpop.permute.xlu0 %871
    %873 = vrot.lane.b32.xlu0 %v868, 32
    %v874 = vpop.permute.xlu0 %873
    %v877 = vmul.f32 %v843, %v872
    %v878 = vmul.f32 %v844, %v874
    %881 = vrot.lane.b32.xlu0 %v877, 64
    %v882 = vpop.permute.xlu0 %881
    %883 = vrot.lane.b32.xlu0 %v878, 64
    %v884 = vpop.permute.xlu0 %883
    %v885 = vsel %vm361, %v882, 0
    %v887 = vsel %vm361, %v884, 0
    %889 = vmatprep.subr.mxu0 %v346
    %890 = vmatpush1.msra.mxu0 %v345
    %891 = vmatprep.subr.mxu0 %v348
    %892 = vmatpush1.msra.mxu0 %v347
    %893 = vmatprep.subr.mxu0 %v350
    %894 = vmatpush1.msra.mxu0 %v349
    %895 = vmatprep.subr.mxu0 %v352
    %896 = vmatpush1.msra.mxu0 %v351
    %897 = vmatprep.subr.mxu0 0.0
    %898 = vmatpush1.msra.mxu0 0.0
    %899 = vmatprep.subr.mxu0 0.0
    %900 = vmatpush1.msra.mxu0 0.0
    %901 = vmatprep.subr.mxu0 0.0
    %902 = vmatpush1.msra.mxu0 0.0
    %903 = vmatprep.subr.mxu0 0.0
    %904 = vmatpush1.msra.mxu0 0.0
    %905 = vmatprep.subr.mxu0 0.0
    %906 = vmatpush1.msra.mxu0 0.0
    %907 = vmatprep.subr.mxu0 0.0
    %908 = vmatpush1.msra.mxu0 0.0
    %909 = vmatprep.subr.mxu0 0.0
    %910 = vmatpush1.msra.mxu0 0.0
    %911 = vmatprep.subr.mxu0 0.0
    %912 = vmatpush1.msra.mxu0 0.0
    %913 = vmatprep.subr.mxu0 0.0
    %914 = vmatpush1.msra.mxu0 0.0
    %915 = vmatprep.subr.mxu0 0.0
    %916 = vmatpush1.msra.mxu0 0.0
    %917 = vmatprep.subr.mxu0 0.0
    %918 = vmatpush1.msra.mxu0 0.0
    %919 = vmatprep.subr.mxu0 0.0
    %920 = vmatpush1.msra.mxu0 0.0
    %921 = vmatprep.subr.mxu0 0.0
    %922 = vmatpush1.msra.mxu0 0.0
    %923 = vmatprep.subr.mxu0 0.0
    %924 = vmatpush1.msra.mxu0 0.0
    %925 = vmatprep.subr.mxu0 0.0
    %926 = vmatpush1.msra.mxu0 0.0
    %927 = vmatprep.subr.mxu0 0.0
    %928 = vmatpush1.msra.mxu0 0.0
    %929 = vmatprep.subr.mxu0 0.0
    %930 = vmatpush1.msra.mxu0 0.0
    %931 = vmatprep.subr.mxu0 0.0
    %932 = vmatpush1.msra.mxu0 0.0
    %933 = vmatprep.subr.mxu0 0.0
    %934 = vmatpush1.msra.mxu0 0.0
    %935 = vmatprep.subr.mxu0 0.0
    %936 = vmatpush1.msra.mxu0 0.0
    %937 = vmatprep.subr.mxu0 0.0
    %938 = vmatpush1.msra.mxu0 0.0
    %939 = vmatprep.subr.mxu0 0.0
    %940 = vmatpush1.msra.mxu0 0.0
    %941 = vmatprep.subr.mxu0 0.0
    %942 = vmatpush1.msra.mxu0 0.0
    %943 = vmatprep.subr.mxu0 0.0
    %944 = vmatpush1.msra.mxu0 0.0
    %945 = vmatprep.subr.mxu0 0.0
    %946 = vmatpush1.msra.mxu0 0.0
    %947 = vmatprep.subr.mxu0 0.0
    %948 = vmatpush1.msra.mxu0 0.0
    %949 = vmatprep.subr.mxu0 0.0
    %950 = vmatpush1.msra.mxu0 0.0
    %951 = vmatprep.subr.mxu0 0.0
    %952 = vmatpush1.msra.mxu0 0.0
    %953 = vmatprep.mubr.f32.mxu0 0.0
    %954 = vmatmul.mubr.f32.gmra.mrb[0].mxu0 %v885
    %v955 = vpop.f32.mrb[0].mxu0
    %v956 = vadd.f32 0.0, %v955
    %v957 = vpop.f32.mrb[0].mxu0
    %v958 = vadd.f32 0.0, %v957
    %959 = vmatprep.mubr.f32.mxu0 0.0
    %960 = vmatmul.mubr.f32.gmra.mrb[0].mxu0 %v887
    %v961 = vpop.f32.mrb[0].mxu0
    %v962 = vadd.f32 0.0, %v961
    %v963 = vpop.f32.mrb[0].mxu0
    %v964 = vadd.f32 0.0, %v963
    %965 = vdwg.mxu0
    %v966 = vsel %vm356, %v956, %v958
    %v967 = vsel %vm357, %v962, %v964
    %v968 = vadd.f32 %v966, %v307
    %v969 = vadd.f32 %v967, %v312
    %v970 = vtanh.pop %v968
    %v971 = vtanh.pop %v969
    %v972 = vmul.f32 %v970, %v359
    %v973 = vmul.f32 %v971, %v359
    %v974 = vadd.f32 %v972, %v360
    %v975 = vadd.f32 %v973, %v360
    %v976 = vmul.f32 %v974, %v865
    %v977 = vmul.f32 %v975, %v866
    %980 = vrot.lane.b32.xlu0 %v974, 32
    %v981 = vpop.permute.xlu0 %980
    %982 = vrot.lane.b32.xlu0 %v975, 32
    %v983 = vpop.permute.xlu0 %982
    %v986 = vmul.f32 %v974, %v981
    %v987 = vmul.f32 %v975, %v983
    %990 = vrot.lane.b32.xlu0 %v986, 32
    %v991 = vpop.permute.xlu0 %990
    %992 = vrot.lane.b32.xlu0 %v987, 32
    %v993 = vpop.permute.xlu0 %992
    %v996 = vadd.f32 %v976, %v991
    %v997 = vadd.f32 %v977, %v993
    %v998 = vtanh.pop %v996
    %v999 = vtanh.pop %v997
    %1002 = vrot.lane.b32.xlu0 %v998, 32
    %v1003 = vpop.permute.xlu0 %1002
    %1004 = vrot.lane.b32.xlu0 %v999, 32
    %v1005 = vpop.permute.xlu0 %1004
    %v1008 = vmul.f32 %v974, %v1003
    %v1009 = vmul.f32 %v975, %v1005
    %1012 = vrot.lane.b32.xlu0 %v1008, 64
    %v1013 = vpop.permute.xlu0 %1012
    %1014 = vrot.lane.b32.xlu0 %v1009, 64
    %v1015 = vpop.permute.xlu0 %1014
    %v1016 = vsel %vm361, %v1013, 0
    %v1018 = vsel %vm361, %v1015, 0
    %1020 = vmatprep.subr.mxu0 %v346
    %1021 = vmatpush1.msra.mxu0 %v345
    %1022 = vmatprep.subr.mxu0 %v348
    %1023 = vmatpush1.msra.mxu0 %v347
    %1024 = vmatprep.subr.mxu0 %v350
    %1025 = vmatpush1.msra.mxu0 %v349
    %1026 = vmatprep.subr.mxu0 %v352
    %1027 = vmatpush1.msra.mxu0 %v351
    %1028 = vmatprep.subr.mxu0 0.0
    %1029 = vmatpush1.msra.mxu0 0.0
    %1030 = vmatprep.subr.mxu0 0.0
    %1031 = vmatpush1.msra.mxu0 0.0
    %1032 = vmatprep.subr.mxu0 0.0
    %1033 = vmatpush1.msra.mxu0 0.0
    %1034 = vmatprep.subr.mxu0 0.0
    %1035 = vmatpush1.msra.mxu0 0.0
    %1036 = vmatprep.subr.mxu0 0.0
    %1037 = vmatpush1.msra.mxu0 0.0
    %1038 = vmatprep.subr.mxu0 0.0
    %1039 = vmatpush1.msra.mxu0 0.0
    %1040 = vmatprep.subr.mxu0 0.0
    %1041 = vmatpush1.msra.mxu0 0.0
    %1042 = vmatprep.subr.mxu0 0.0
    %1043 = vmatpush1.msra.mxu0 0.0
    %1044 = vmatprep.subr.mxu0 0.0
    %1045 = vmatpush1.msra.mxu0 0.0
    %1046 = vmatprep.subr.mxu0 0.0
    %1047 = vmatpush1.msra.mxu0 0.0
    %1048 = vmatprep.subr.mxu0 0.0
    %1049 = vmatpush1.msra.mxu0 0.0
    %1050 = vmatprep.subr.mxu0 0.0
    %1051 = vmatpush1.msra.mxu0 0.0
    %1052 = vmatprep.subr.mxu0 0.0
    %1053 = vmatpush1.msra.mxu0 0.0
    %1054 = vmatprep.subr.mxu0 0.0
    %1055 = vmatpush1.msra.mxu0 0.0
    %1056 = vmatprep.subr.mxu0 0.0
    %1057 = vmatpush1.msra.mxu0 0.0
    %1058 = vmatprep.subr.mxu0 0.0
    %1059 = vmatpush1.msra.mxu0 0.0
    %1060 = vmatprep.subr.mxu0 0.0
    %1061 = vmatpush1.msra.mxu0 0.0
    %1062 = vmatprep.subr.mxu0 0.0
    %1063 = vmatpush1.msra.mxu0 0.0
    %1064 = vmatprep.subr.mxu0 0.0
    %1065 = vmatpush1.msra.mxu0 0.0
    %1066 = vmatprep.subr.mxu0 0.0
    %1067 = vmatpush1.msra.mxu0 0.0
    %1068 = vmatprep.subr.mxu0 0.0
    %1069 = vmatpush1.msra.mxu0 0.0
    %1070 = vmatprep.subr.mxu0 0.0
    %1071 = vmatpush1.msra.mxu0 0.0
    %1072 = vmatprep.subr.mxu0 0.0
    %1073 = vmatpush1.msra.mxu0 0.0
    %1074 = vmatprep.subr.mxu0 0.0
    %1075 = vmatpush1.msra.mxu0 0.0
    %1076 = vmatprep.subr.mxu0 0.0
    %1077 = vmatpush1.msra.mxu0 0.0
    %1078 = vmatprep.subr.mxu0 0.0
    %1079 = vmatpush1.msra.mxu0 0.0
    %1080 = vmatprep.subr.mxu0 0.0
    %1081 = vmatpush1.msra.mxu0 0.0
    %1082 = vmatprep.subr.mxu0 0.0
    %1083 = vmatpush1.msra.mxu0 0.0
    %1084 = vmatprep.mubr.f32.mxu0 0.0
    %1085 = vmatmul.mubr.f32.gmra.mrb[0].mxu0 %v1016
    %v1086 = vpop.f32.mrb[0].mxu0
    %v1087 = vadd.f32 0.0, %v1086
    %v1088 = vpop.f32.mrb[0].mxu0
    %v1089 = vadd.f32 0.0, %v1088
    %1090 = vmatprep.mubr.f32.mxu0 0.0
    %1091 = vmatmul.mubr.f32.gmra.mrb[0].mxu0 %v1018
    %v1092 = vpop.f32.mrb[0].mxu0
    %v1093 = vadd.f32 0.0, %v1092
    %v1094 = vpop.f32.mrb[0].mxu0
    %v1095 = vadd.f32 0.0, %v1094
    %1096 = vdwg.mxu0
    %v1097 = vsel %vm356, %v1087, %v1089
    %v1098 = vsel %vm357, %v1093, %v1095
    %v1099 = vadd.f32 %v1097, %v317
    %v1100 = vadd.f32 %v1098, %v322
    %v1101 = vtanh.pop %v1099
    %v1102 = vtanh.pop %v1100
    %v1103 = vmul.f32 %v1101, %v359
    %v1104 = vmul.f32 %v1102, %v359
    %v1105 = vadd.f32 %v1103, %v360
    %v1106 = vadd.f32 %v1104, %v360
    %v1107 = vmul.f32 %v1105, %v996
    %v1108 = vmul.f32 %v1106, %v997
    %1111 = vrot.lane.b32.xlu0 %v1105, 32
    %v1112 = vpop.permute.xlu0 %1111
    %1113 = vrot.lane.b32.xlu0 %v1106, 32
    %v1114 = vpop.permute.xlu0 %1113
    %v1117 = vmul.f32 %v1105, %v1112
    %v1118 = vmul.f32 %v1106, %v1114
    %1121 = vrot.lane.b32.xlu0 %v1117, 32
    %v1122 = vpop.permute.xlu0 %1121
    %1123 = vrot.lane.b32.xlu0 %v1118, 32
    %v1124 = vpop.permute.xlu0 %1123
    %v1127 = vadd.f32 %v1107, %v1122
    %v1128 = vadd.f32 %v1108, %v1124
    %v1129 = vtanh.pop %v1127
    %v1130 = vtanh.pop %v1128
    %1133 = vrot.lane.b32.xlu0 %v1129, 32
    %v1134 = vpop.permute.xlu0 %1133
    %1135 = vrot.lane.b32.xlu0 %v1130, 32
    %v1136 = vpop.permute.xlu0 %1135
    %v1139 = vmul.f32 %v1105, %v1134
    %v1140 = vmul.f32 %v1106, %v1136
    %1143 = vrot.lane.b32.xlu0 %v1139, 64
    %v1144 = vpop.permute.xlu0 %1143
    %1145 = vrot.lane.b32.xlu0 %v1140, 64
    %v1146 = vpop.permute.xlu0 %1145
    %v1147 = vsel %vm361, %v1144, 0
    %v1149 = vsel %vm361, %v1146, 0
    %1151 = vmatprep.subr.mxu0 %v346
    %1152 = vmatpush1.msra.mxu0 %v345
    %1153 = vmatprep.subr.mxu0 %v348
    %1154 = vmatpush1.msra.mxu0 %v347
    %1155 = vmatprep.subr.mxu0 %v350
    %1156 = vmatpush1.msra.mxu0 %v349
    %1157 = vmatprep.subr.mxu0 %v352
    %1158 = vmatpush1.msra.mxu0 %v351
    %1159 = vmatprep.subr.mxu0 0.0
    %1160 = vmatpush1.msra.mxu0 0.0
    %1161 = vmatprep.subr.mxu0 0.0
    %1162 = vmatpush1.msra.mxu0 0.0
    %1163 = vmatprep.subr.mxu0 0.0
    %1164 = vmatpush1.msra.mxu0 0.0
    %1165 = vmatprep.subr.mxu0 0.0
    %1166 = vmatpush1.msra.mxu0 0.0
    %1167 = vmatprep.subr.mxu0 0.0
    %1168 = vmatpush1.msra.mxu0 0.0
    %1169 = vmatprep.subr.mxu0 0.0
    %1170 = vmatpush1.msra.mxu0 0.0
    %1171 = vmatprep.subr.mxu0 0.0
    %1172 = vmatpush1.msra.mxu0 0.0
    %1173 = vmatprep.subr.mxu0 0.0
    %1174 = vmatpush1.msra.mxu0 0.0
    %1175 = vmatprep.subr.mxu0 0.0
    %1176 = vmatpush1.msra.mxu0 0.0
    %1177 = vmatprep.subr.mxu0 0.0
    %1178 = vmatpush1.msra.mxu0 0.0
    %1179 = vmatprep.subr.mxu0 0.0
    %1180 = vmatpush1.msra.mxu0 0.0
    %1181 = vmatprep.subr.mxu0 0.0
    %1182 = vmatpush1.msra.mxu0 0.0
    %1183 = vmatprep.subr.mxu0 0.0
    %1184 = vmatpush1.msra.mxu0 0.0
    %1185 = vmatprep.subr.mxu0 0.0
    %1186 = vmatpush1.msra.mxu0 0.0
    %1187 = vmatprep.subr.mxu0 0.0
    %1188 = vmatpush1.msra.mxu0 0.0
    %1189 = vmatprep.subr.mxu0 0.0
    %1190 = vmatpush1.msra.mxu0 0.0
    %1191 = vmatprep.subr.mxu0 0.0
    %1192 = vmatpush1.msra.mxu0 0.0
    %1193 = vmatprep.subr.mxu0 0.0
    %1194 = vmatpush1.msra.mxu0 0.0
    %1195 = vmatprep.subr.mxu0 0.0
    %1196 = vmatpush1.msra.mxu0 0.0
    %1197 = vmatprep.subr.mxu0 0.0
    %1198 = vmatpush1.msra.mxu0 0.0
    %1199 = vmatprep.subr.mxu0 0.0
    %1200 = vmatpush1.msra.mxu0 0.0
    %1201 = vmatprep.subr.mxu0 0.0
    %1202 = vmatpush1.msra.mxu0 0.0
    %1203 = vmatprep.subr.mxu0 0.0
    %1204 = vmatpush1.msra.mxu0 0.0
    %1205 = vmatprep.subr.mxu0 0.0
    %1206 = vmatpush1.msra.mxu0 0.0
    %1207 = vmatprep.subr.mxu0 0.0
    %1208 = vmatpush1.msra.mxu0 0.0
    %1209 = vmatprep.subr.mxu0 0.0
    %1210 = vmatpush1.msra.mxu0 0.0
    %1211 = vmatprep.subr.mxu0 0.0
    %1212 = vmatpush1.msra.mxu0 0.0
    %1213 = vmatprep.subr.mxu0 0.0
    %1214 = vmatpush1.msra.mxu0 0.0
    %1215 = vmatprep.mubr.f32.mxu0 0.0
    %1216 = vmatmul.mubr.f32.gmra.mrb[0].mxu0 %v1147
    %v1217 = vpop.f32.mrb[0].mxu0
    %v1218 = vadd.f32 0.0, %v1217
    %v1219 = vpop.f32.mrb[0].mxu0
    %v1220 = vadd.f32 0.0, %v1219
    %1221 = vmatprep.mubr.f32.mxu0 0.0
    %1222 = vmatmul.mubr.f32.gmra.mrb[0].mxu0 %v1149
    %v1223 = vpop.f32.mrb[0].mxu0
    %v1224 = vadd.f32 0.0, %v1223
    %v1225 = vpop.f32.mrb[0].mxu0
    %v1226 = vadd.f32 0.0, %v1225
    %1227 = vdwg.mxu0
    %v1228 = vsel %vm356, %v1218, %v1220
    %v1229 = vsel %vm357, %v1224, %v1226
    %v1230 = vadd.f32 %v1228, %v327
    %v1231 = vadd.f32 %v1229, %v332
    %v1232 = vtanh.pop %v1230
    %v1233 = vtanh.pop %v1231
    %v1234 = vmul.f32 %v1232, %v359
    %v1235 = vmul.f32 %v1233, %v359
    %v1236 = vadd.f32 %v1234, %v360
    %v1237 = vadd.f32 %v1235, %v360
    %v1238 = vmul.f32 %v1236, %v1127
    %v1239 = vmul.f32 %v1237, %v1128
    %1242 = vrot.lane.b32.xlu0 %v1236, 32
    %v1243 = vpop.permute.xlu0 %1242
    %1244 = vrot.lane.b32.xlu0 %v1237, 32
    %v1245 = vpop.permute.xlu0 %1244
    %v1248 = vmul.f32 %v1236, %v1243
    %v1249 = vmul.f32 %v1237, %v1245
    %1252 = vrot.lane.b32.xlu0 %v1248, 32
    %v1253 = vpop.permute.xlu0 %1252
    %1254 = vrot.lane.b32.xlu0 %v1249, 32
    %v1255 = vpop.permute.xlu0 %1254
    %v1258 = vadd.f32 %v1238, %v1253
    %v1259 = vadd.f32 %v1239, %v1255
    %v1260 = vtanh.pop %v1258
    %v1261 = vtanh.pop %v1259
    %1264 = vrot.lane.b32.xlu0 %v1260, 32
    %v1265 = vpop.permute.xlu0 %1264
    %1266 = vrot.lane.b32.xlu0 %v1261, 32
    %v1267 = vpop.permute.xlu0 %1266
    %v1270 = vmul.f32 %v1236, %v1265
    %v1271 = vmul.f32 %v1237, %v1267
    %1274 = vrot.lane.b32.xlu0 %v1270, 64
    %v1275 = vpop.permute.xlu0 %1274
    %1276 = vrot.lane.b32.xlu0 %v1271, 64
    %v1277 = vpop.permute.xlu0 %1276
    %v1278 = vsel %vm361, %v1275, 0
    %v1280 = vsel %vm361, %v1277, 0
    %1282 = vmatprep.subr.mxu0 %v346
    %1283 = vmatpush1.msra.mxu0 %v345
    %1284 = vmatprep.subr.mxu0 %v348
    %1285 = vmatpush1.msra.mxu0 %v347
    %1286 = vmatprep.subr.mxu0 %v350
    %1287 = vmatpush1.msra.mxu0 %v349
    %1288 = vmatprep.subr.mxu0 %v352
    %1289 = vmatpush1.msra.mxu0 %v351
    %1290 = vmatprep.subr.mxu0 0.0
    %1291 = vmatpush1.msra.mxu0 0.0
    %1292 = vmatprep.subr.mxu0 0.0
    %1293 = vmatpush1.msra.mxu0 0.0
    %1294 = vmatprep.subr.mxu0 0.0
    %1295 = vmatpush1.msra.mxu0 0.0
    %1296 = vmatprep.subr.mxu0 0.0
    %1297 = vmatpush1.msra.mxu0 0.0
    %1298 = vmatprep.subr.mxu0 0.0
    %1299 = vmatpush1.msra.mxu0 0.0
    %1300 = vmatprep.subr.mxu0 0.0
    %1301 = vmatpush1.msra.mxu0 0.0
    %1302 = vmatprep.subr.mxu0 0.0
    %1303 = vmatpush1.msra.mxu0 0.0
    %1304 = vmatprep.subr.mxu0 0.0
    %1305 = vmatpush1.msra.mxu0 0.0
    %1306 = vmatprep.subr.mxu0 0.0
    %1307 = vmatpush1.msra.mxu0 0.0
    %1308 = vmatprep.subr.mxu0 0.0
    %1309 = vmatpush1.msra.mxu0 0.0
    %1310 = vmatprep.subr.mxu0 0.0
    %1311 = vmatpush1.msra.mxu0 0.0
    %1312 = vmatprep.subr.mxu0 0.0
    %1313 = vmatpush1.msra.mxu0 0.0
    %1314 = vmatprep.subr.mxu0 0.0
    %1315 = vmatpush1.msra.mxu0 0.0
    %1316 = vmatprep.subr.mxu0 0.0
    %1317 = vmatpush1.msra.mxu0 0.0
    %1318 = vmatprep.subr.mxu0 0.0
    %1319 = vmatpush1.msra.mxu0 0.0
    %1320 = vmatprep.subr.mxu0 0.0
    %1321 = vmatpush1.msra.mxu0 0.0
    %1322 = vmatprep.subr.mxu0 0.0
    %1323 = vmatpush1.msra.mxu0 0.0
    %1324 = vmatprep.subr.mxu0 0.0
    %1325 = vmatpush1.msra.mxu0 0.0
    %1326 = vmatprep.subr.mxu0 0.0
    %1327 = vmatpush1.msra.mxu0 0.0
    %1328 = vmatprep.subr.mxu0 0.0
    %1329 = vmatpush1.msra.mxu0 0.0
    %1330 = vmatprep.subr.mxu0 0.0
    %1331 = vmatpush1.msra.mxu0 0.0
    %1332 = vmatprep.subr.mxu0 0.0
    %1333 = vmatpush1.msra.mxu0 0.0
    %1334 = vmatprep.subr.mxu0 0.0
    %1335 = vmatpush1.msra.mxu0 0.0
    %1336 = vmatprep.subr.mxu0 0.0
    %1337 = vmatpush1.msra.mxu0 0.0
    %1338 = vmatprep.subr.mxu0 0.0
    %1339 = vmatpush1.msra.mxu0 0.0
    %1340 = vmatprep.subr.mxu0 0.0
    %1341 = vmatpush1.msra.mxu0 0.0
    %1342 = vmatprep.subr.mxu0 0.0
    %1343 = vmatpush1.msra.mxu0 0.0
    %1344 = vmatprep.subr.mxu0 0.0
    %1345 = vmatpush1.msra.mxu0 0.0
    %1346 = vmatprep.mubr.f32.mxu0 0.0
    %1347 = vmatmul.mubr.f32.gmra.mrb[0].mxu0 %v1278
    %v1348 = vpop.f32.mrb[0].mxu0
    %v1349 = vadd.f32 0.0, %v1348
    %v1350 = vpop.f32.mrb[0].mxu0
    %v1351 = vadd.f32 0.0, %v1350
    %1352 = vmatprep.mubr.f32.mxu0 0.0
    %1353 = vmatmul.mubr.f32.gmra.mrb[0].mxu0 %v1280
    %v1354 = vpop.f32.mrb[0].mxu0
    %v1355 = vadd.f32 0.0, %v1354
    %v1356 = vpop.f32.mrb[0].mxu0
    %v1357 = vadd.f32 0.0, %v1356
    %1358 = vdwg.mxu0
    %v1359 = vsel %vm356, %v1349, %v1351
    %v1360 = vsel %vm357, %v1355, %v1357
    %v1361 = vadd.f32 %v1359, %v337
    %v1362 = vadd.f32 %v1360, %v342
    %v1363 = vtanh.pop %v1361
    %v1364 = vtanh.pop %v1362
    %v1365 = vmul.f32 %v1363, %v359
    %v1366 = vmul.f32 %v1364, %v359
    %v1367 = vadd.f32 %v1365, %v360
    %v1368 = vadd.f32 %v1366, %v360
    %v1369 = vmul.f32 %v1367, %v1258
    %v1370 = vmul.f32 %v1368, %v1259
    %1373 = vrot.lane.b32.xlu0 %v1367, 32
    %v1374 = vpop.permute.xlu0 %1373
    %1375 = vrot.lane.b32.xlu0 %v1368, 32
    %v1376 = vpop.permute.xlu0 %1375
    %v1379 = vmul.f32 %v1367, %v1374
    %v1380 = vmul.f32 %v1368, %v1376
    %1383 = vrot.lane.b32.xlu0 %v1379, 32
    %v1384 = vpop.permute.xlu0 %1383
    %1385 = vrot.lane.b32.xlu0 %v1380, 32
    %v1386 = vpop.permute.xlu0 %1385
    %v1389 = vadd.f32 %v1369, %v1384
    %v1390 = vadd.f32 %v1370, %v1386
    %v1391 = vtanh.pop %v1389
    %v1392 = vtanh.pop %v1390
    %1395 = vrot.lane.b32.xlu0 %v1391, 32
    %v1396 = vpop.permute.xlu0 %1395
    %1397 = vrot.lane.b32.xlu0 %v1392, 32
    %v1398 = vpop.permute.xlu0 %1397
    %v1401 = vmul.f32 %v1367, %v1396
    %v1402 = vmul.f32 %v1368, %v1398
    %v1403 = vld [vmem:[%s3] sm:$0xff]
    %v1404 = vld [vmem:[%s3 + $0x8] sm:$0xff]
    %v1405 = vld [vmem:[%s3 + $0x10] sm:$0xff]
    %v1406 = vld [vmem:[%s3 + $0x18] sm:$0xff]
    %v1407 = vld [vmem:[%s3 + $0x20] sm:$0xff]
    %v1408 = vld [vmem:[%s3 + $0x28] sm:$0xff]
    %v1409 = vld [vmem:[%s3 + $0x30] sm:$0xff]
    %v1410 = vld [vmem:[%s3 + $0x38] sm:$0xff]
    %1412 = vrot.lane.b32.xlu0 %v1402, 64
    %v1413 = vpop.permute.xlu0 %1412
    %v1414 = vsel %vm361, %v1413, 0
    %1416 = vmatprep.subr.mxu0 0.0
    %1417 = vmatpush1.msra.mxu0 %v1407
    %1418 = vmatprep.subr.mxu0 0.0
    %1419 = vmatpush1.msra.mxu0 %v1408
    %1420 = vmatprep.subr.mxu0 0.0
    %1421 = vmatpush1.msra.mxu0 %v1409
    %1422 = vmatprep.subr.mxu0 0.0
    %1423 = vmatpush1.msra.mxu0 %v1410
    %1424 = vmatprep.subr.mxu0 0.0
    %1425 = vmatpush1.msra.mxu0 0.0
    %1426 = vmatprep.subr.mxu0 0.0
    %1427 = vmatpush1.msra.mxu0 0.0
    %1428 = vmatprep.subr.mxu0 0.0
    %1429 = vmatpush1.msra.mxu0 0.0
    %1430 = vmatprep.subr.mxu0 0.0
    %1431 = vmatpush1.msra.mxu0 0.0
    %1432 = vmatprep.subr.mxu0 0.0
    %1433 = vmatpush1.msra.mxu0 0.0
    %1434 = vmatprep.subr.mxu0 0.0
    %1435 = vmatpush1.msra.mxu0 0.0
    %1436 = vmatprep.subr.mxu0 0.0
    %1437 = vmatpush1.msra.mxu0 0.0
    %1438 = vmatprep.subr.mxu0 0.0
    %1439 = vmatpush1.msra.mxu0 0.0
    %1440 = vmatprep.subr.mxu0 0.0
    %1441 = vmatpush1.msra.mxu0 0.0
    %1442 = vmatprep.subr.mxu0 0.0
    %1443 = vmatpush1.msra.mxu0 0.0
    %1444 = vmatprep.subr.mxu0 0.0
    %1445 = vmatpush1.msra.mxu0 0.0
    %1446 = vmatprep.subr.mxu0 0.0
    %1447 = vmatpush1.msra.mxu0 0.0
    %1448 = vmatprep.subr.mxu0 0.0
    %1449 = vmatpush1.msra.mxu0 0.0
    %1450 = vmatprep.subr.mxu0 0.0
    %1451 = vmatpush1.msra.mxu0 0.0
    %1452 = vmatprep.subr.mxu0 0.0
    %1453 = vmatpush1.msra.mxu0 0.0
    %1454 = vmatprep.subr.mxu0 0.0
    %1455 = vmatpush1.msra.mxu0 0.0
    %1456 = vmatprep.subr.mxu0 0.0
    %1457 = vmatpush1.msra.mxu0 0.0
    %1458 = vmatprep.subr.mxu0 0.0
    %1459 = vmatpush1.msra.mxu0 0.0
    %1460 = vmatprep.subr.mxu0 0.0
    %1461 = vmatpush1.msra.mxu0 0.0
    %1462 = vmatprep.subr.mxu0 0.0
    %1463 = vmatpush1.msra.mxu0 0.0
    %1464 = vmatprep.subr.mxu0 0.0
    %1465 = vmatpush1.msra.mxu0 0.0
    %1466 = vmatprep.subr.mxu0 0.0
    %1467 = vmatpush1.msra.mxu0 0.0
    %1468 = vmatprep.subr.mxu0 0.0
    %1469 = vmatpush1.msra.mxu0 0.0
    %1470 = vmatprep.subr.mxu0 0.0
    %1471 = vmatpush1.msra.mxu0 0.0
    %1472 = vmatprep.subr.mxu0 0.0
    %1473 = vmatpush1.msra.mxu0 0.0
    %1474 = vmatprep.subr.mxu0 0.0
    %1475 = vmatpush1.msra.mxu0 0.0
    %1476 = vmatprep.subr.mxu0 0.0
    %1477 = vmatpush1.msra.mxu0 0.0
    %1478 = vmatprep.subr.mxu0 0.0
    %1479 = vmatpush1.msra.mxu0 0.0
    %1480 = vmatprep.mubr.f32.mxu0 0.0
    %1481 = vmatmul.mubr.f32.gmra.mrb[0].mxu0 %v1414
    %v1482 = vpop.f32.mrb[0].mxu0
    %v1483 = vadd.f32 0.0, %v1482
    %v1484 = vpop.f32.mrb[0].mxu0
    %1485 = vdwg.mxu0
    %1487 = vrot.lane.b32.xlu0 %v1401, 64
    %v1488 = vpop.permute.xlu0 %1487
    %v1489 = vsel %vm361, %v1488, 0
    %1491 = vmatprep.subr.mxu0 0.0
    %1492 = vmatpush1.msra.mxu0 %v1403
    %1493 = vmatprep.subr.mxu0 0.0
    %1494 = vmatpush1.msra.mxu0 %v1404
    %1495 = vmatprep.subr.mxu0 0.0
    %1496 = vmatpush1.msra.mxu0 %v1405
    %1497 = vmatprep.subr.mxu0 0.0
    %1498 = vmatpush1.msra.mxu0 %v1406
    %1499 = vmatprep.subr.mxu0 0.0
    %1500 = vmatpush1.msra.mxu0 0.0
    %1501 = vmatprep.subr.mxu0 0.0
    %1502 = vmatpush1.msra.mxu0 0.0
    %1503 = vmatprep.subr.mxu0 0.0
    %1504 = vmatpush1.msra.mxu0 0.0
    %1505 = vmatprep.subr.mxu0 0.0
    %1506 = vmatpush1.msra.mxu0 0.0
    %1507 = vmatprep.subr.mxu0 0.0
    %1508 = vmatpush1.msra.mxu0 0.0
    %1509 = vmatprep.subr.mxu0 0.0
    %1510 = vmatpush1.msra.mxu0 0.0
    %1511 = vmatprep.subr.mxu0 0.0
    %1512 = vmatpush1.msra.mxu0 0.0
    %1513 = vmatprep.subr.mxu0 0.0
    %1514 = vmatpush1.msra.mxu0 0.0
    %1515 = vmatprep.subr.mxu0 0.0
    %1516 = vmatpush1.msra.mxu0 0.0
    %1517 = vmatprep.subr.mxu0 0.0
    %1518 = vmatpush1.msra.mxu0 0.0
    %1519 = vmatprep.subr.mxu0 0.0
    %1520 = vmatpush1.msra.mxu0 0.0
    %1521 = vmatprep.subr.mxu0 0.0
    %1522 = vmatpush1.msra.mxu0 0.0
    %1523 = vmatprep.subr.mxu0 0.0
    %1524 = vmatpush1.msra.mxu0 0.0
    %1525 = vmatprep.subr.mxu0 0.0
    %1526 = vmatpush1.msra.mxu0 0.0
    %1527 = vmatprep.subr.mxu0 0.0
    %1528 = vmatpush1.msra.mxu0 0.0
    %1529 = vmatprep.subr.mxu0 0.0
    %1530 = vmatpush1.msra.mxu0 0.0
    %1531 = vmatprep.subr.mxu0 0.0
    %1532 = vmatpush1.msra.mxu0 0.0
    %1533 = vmatprep.subr.mxu0 0.0
    %1534 = vmatpush1.msra.mxu0 0.0
    %1535 = vmatprep.subr.mxu0 0.0
    %1536 = vmatpush1.msra.mxu0 0.0
    %1537 = vmatprep.subr.mxu0 0.0
    %1538 = vmatpush1.msra.mxu0 0.0
    %1539 = vmatprep.subr.mxu0 0.0
    %1540 = vmatpush1.msra.mxu0 0.0
    %1541 = vmatprep.subr.mxu0 0.0
    %1542 = vmatpush1.msra.mxu0 0.0
    %1543 = vmatprep.subr.mxu0 0.0
    %1544 = vmatpush1.msra.mxu0 0.0
    %1545 = vmatprep.subr.mxu0 0.0
    %1546 = vmatpush1.msra.mxu0 0.0
    %1547 = vmatprep.subr.mxu0 0.0
    %1548 = vmatpush1.msra.mxu0 0.0
    %1549 = vmatprep.subr.mxu0 0.0
    %1550 = vmatpush1.msra.mxu0 0.0
    %1551 = vmatprep.subr.mxu0 0.0
    %1552 = vmatpush1.msra.mxu0 0.0
    %1553 = vmatprep.subr.mxu0 0.0
    %1554 = vmatpush1.msra.mxu0 0.0
    %1555 = vmatprep.mubr.f32.mxu0 0.0
    %1556 = vmatmul.mubr.f32.gmra.mrb[0].mxu0 %v1489
    %v1557 = vpop.f32.mrb[0].mxu0
    %v1558 = vadd.f32 %v1483, %v1557
    %v1559 = vpop.f32.mrb[0].mxu0
    %1560 = vdwg.mxu0
    %v1561 = vld [vmem:[%s4] sm:$0x1]
    %v1563 = vlaneseq
    %v1564 = vshrl.u32 %v1563, 7
    %v1565 = vsub.s32 0, %v1564
    %v1566 = vrot.slane %v1561, %v1565
    %v1568 = vadd.f32 %v1558, %v1566
    %1569 = vst [vmem:[#allocation5] sm:$0xff] %v1568
    // Predicated region
    $region26: #{tpu_custom_call.1} parent=1 // pred_check
      _
    $region27: #{tpu_custom_call.1} parent=1 // pred_check_branch
      %1571 = sbr.rel (0) target = $region29
    $region28: #{tpu_custom_call.1} parent=1 // pred_region
      %s1573 = ssub.s32 128, 128
      %1574 = vsyncadd [#allocation4], %s1573
      %s1576 = sshll.u32 [#allocation5], 4
      %s1577 = int_to_ptr.vmem [resolvable:$true] %s1576
      %1579 = dma.vmem_to_hbm [thread:$0]  %s1577, 128, %s5, [#allocation4]
    $region29: #{tpu_custom_call.1} parent=1 // pred_fallthru
      _
    // Predicated region
    $region30: #{tpu_custom_call.1} parent=1 // pred_check
      _
    $region31: #{tpu_custom_call.1} parent=1 // pred_check_branch
      %1581 = sbr.rel (0) target = $region33
    $region32: #{tpu_custom_call.1} parent=1 // pred_region
      %1582 = dma.done [#allocation4], 128
    $region33: #{tpu_custom_call.1} parent=1 // pred_fallthru
      _
    %1583 = vsyncpa [#allocation3], 1
    %1584 = vsyncpa [#allocation4], 1

</llo_original>
